<compile_context>
chip_gen: v5e
topology: v5e:2x2
jax: 0.10.0
libtpu: 0.0.40
codegen_flags: <defaults>
</compile_context>

<pallas_src>
import functools

import jax
import jax.numpy as jnp
from jax import lax
from jax.experimental import pallas as pl
from jax.experimental.pallas import tpu as pltpu


def _huber(g):
    a = jnp.abs(g)
    return jnp.where(a < 1.0, 0.5 * g * g, a - 0.5)


def _fused_grad_loss_kernel(pc_ref, tc_ref, mc_ref, ph_ref, th_ref, mh_ref,
                            out_ref, *, scales, H, W, TH, HALO, out_w):
    """One grid step = (image b, row-tile h).

    For every scale s (step = 2**s) it computes, over this tile's rows of the
    exact x[::step, ::step] element selection:
        lane s          : partial image_loss (huber(grad_x)*mask_x +
                          huber(grad_y)*mask_y summed over the tile)
        lane scales + s : raw (un-clamped) subsampled mask sum of the tile
    and writes them into a 128-lane-wide output row (no carried grid state).
    """
    h = pl.program_id(1)

    pc = pc_ref[0].astype(jnp.float32)     # (TH, W)   current row tile
    tc = tc_ref[0].astype(jnp.float32)
    mc = mc_ref[0].astype(jnp.float32)
    ph = ph_ref[0].astype(jnp.float32)     # (HALO, W) rows just below the tile
    th_ = th_ref[0].astype(jnp.float32)
    mh = mh_ref[0].astype(jnp.float32)

    # Extended (TH+HALO, W) arrays so every +step row neighbour is local.
    diff = jnp.concatenate([(pc - tc) * mc, (ph - th_) * mh], axis=0)
    m = jnp.concatenate([mc, mh], axis=0)

    THE = TH + HALO
    r_loc = lax.broadcasted_iota(jnp.int32, (THE, 1), 0)   # narrow iotas only
    g_row = r_loc + h * TH                                  # global row index
    col = lax.broadcasted_iota(jnp.int32, (1, W), 1)
    lane = lax.broadcasted_iota(jnp.int32, (1, out_w), 1)

    src_row = r_loc < TH          # halo rows are never "source" rows

    out_row = jnp.zeros((1, out_w), jnp.float32)

    for s in range(scales):
        step = 1 << s
        if step == 1:
            # scale 0: every element is on-grid -> skip the bit masks.
            row_ok = src_row
            col_ok = None
        else:
            # positions kept by x[::step, ::step] (steps are powers of two)
            row_ok = src_row & ((g_row & (step - 1)) == 0)
            col_ok = (col & (step - 1)) == 0

        image_loss = jnp.float32(0.0)

        if step < W:
            # neighbour `step` columns to the right via lane rotation
            # (shift W-step == jnp.roll(x, -step, axis=1)); wrapped columns
            # are removed by the (col+step)<W mask below.
            dxn = pltpu.roll(diff, W - step, axis=1)
            mxn = pltpu.roll(m, W - step, axis=1)
            tx = _huber(dxn - diff) * (m * mxn)
            cmask = (col + step) < W
            if col_ok is not None:
                cmask = cmask & col_ok
            # use where (select), not multiply: halo/wrapped values may be junk
            tx = jnp.where(cmask, tx, 0.0)
            tx = jnp.where(row_ok, tx, 0.0)
            image_loss = image_loss + jnp.sum(tx)

        if step < H:
            # neighbour `step` rows down via sublane rotation over the
            # extended (tile + halo) arrays; junk rows masked by g_row+step<H.
            dyn = pltpu.roll(diff, THE - step, axis=0)
            myn = pltpu.roll(m, THE - step, axis=0)
            ty = _huber(dyn - diff) * (m * myn)
            rmask = row_ok & ((g_row + step) < H)
            ty = jnp.where(rmask, ty, 0.0)
            if col_ok is not None:
                ty = jnp.where(col_ok, ty, 0.0)
            image_loss = image_loss + jnp.sum(ty)

        # raw subsampled mask sum of this tile (clamped to 1.0 in the wrapper,
        # after summing over tiles)
        msel = jnp.where(row_ok, m, 0.0)
        if col_ok is not None:
            msel = jnp.where(col_ok, msel, 0.0)
        m_sum = jnp.sum(msel)

        out_row = jnp.where(lane == s, image_loss, out_row)
        out_row = jnp.where(lane == (scales + s), m_sum, out_row)

    out_ref[0] = out_row


def _plan_row_tiling(B, H, W, itemsize, scales):
    """Pick (TH, HALO, nH, vmem_need): row tiling so each grid step fits VMEM
    and, when the batch alone cannot feed both v7x TensorCores, the row axis
    provides extra parallel grid steps."""
    max_step = 1 << max(scales - 1, 0)
    halo_full = 8 * ((max_step + 7) // 8)     # halo rounded up to sublanes

    def vmem_need(th, halo):
        the = th + halo
        inputs = 3 * 2 * the * W * itemsize   # cur + halo, double-buffered
        scratch = 8 * the * W * 4             # live f32 intermediates
        return inputs + scratch

    budget = 24 << 20
    halo_single = halo_full if H >= halo_full else H
    fits_whole = vmem_need(H, halo_single) <= budget
    want_split = (not fits_whole) or (B < 2 and H >= 2 * max(halo_full, 64))

    th_sel, halo_sel, nh = H, halo_single, 1
    if want_split:
        legal = [th for th in (1024, 512, 256, 128, 64, 32, 16, 8)
                 if th < H and H % th == 0 and th % halo_full == 0]
        fitting = [th for th in legal if vmem_need(th, halo_full) <= budget]
        if fitting:
            th_sel = fitting[0]        # largest tile that fits the budget
        elif legal:
            th_sel = legal[-1]         # smallest legal tile; best we can do
        if th_sel != H:
            halo_sel, nh = halo_full, H // th_sel
    return th_sel, halo_sel, nh, vmem_need(th_sel, halo_sel)


def _per_image_sums(prediction, target, mask, scales):
    """Returns (num, den): per-image, per-scale image_loss and clamped M."""
    B, H, W = prediction.shape
    itemsize = max(jnp.dtype(a.dtype).itemsize
                   for a in (prediction, target, mask))
    TH, HALO, nH, need = _plan_row_tiling(B, H, W, itemsize, scales)
    out_w = 128 * max(1, pl.cdiv(2 * scales, 128))   # lane-dense output row

    try:
        vmem_cap = getattr(pltpu.get_tpu_info(), "vmem_capacity_bytes",
                           64 << 20)
    except Exception:
        vmem_cap = 64 << 20
    vmem_limit = int(min(max(int(need * 1.5) + (4 << 20), 16 << 20),
                         int(vmem_cap * 0.85)))

    kernel = functools.partial(_fused_grad_loss_kernel, scales=scales,
                               H=H, W=W, TH=TH, HALO=HALO, out_w=out_w)

    cur_spec = pl.BlockSpec((1, TH, W), lambda b, h: (b, h, 0))
    halo_blocks_per_tile = TH // HALO
    last_h = nH - 1
    # Halo = first HALO rows of the NEXT row-tile; clamped on the last tile
    # (its contents there are fully masked out by the g_row+step<H predicate).
    halo_spec = pl.BlockSpec(
        (1, HALO, W),
        lambda b, h: (b, jnp.minimum(h + 1, last_h) * halo_blocks_per_tile, 0))
    out_spec = pl.BlockSpec((1, 1, out_w), lambda b, h: (b, 0, h))

    out = pl.pallas_call(
        kernel,
        out_shape=jax.ShapeDtypeStruct((B, 1, nH * out_w), jnp.float32),
        grid_spec=pltpu.PrefetchScalarGridSpec(
            num_scalar_prefetch=0,
            grid=(B, nH),
            in_specs=[cur_spec, cur_spec, cur_spec,
                      halo_spec, halo_spec, halo_spec],
            out_specs=out_spec,
        ),
        compiler_params=pltpu.CompilerParams(
            # no cross-step state -> both axes truly parallel (2 TCs on v7x)
            dimension_semantics=("parallel", "parallel"),
            vmem_limit_bytes=vmem_limit),
    )(prediction, target, mask, prediction, target, mask)

    out = out.reshape(B, nH, out_w)
    num = jnp.sum(out[:, :, :scales], axis=1)                  # (B, scales)
    den = jnp.maximum(jnp.sum(out[:, :, scales:2 * scales], axis=1), 1.0)
    return num, den


def gradient_matching_term(prediction, target, mask, scales=4,
                           reduction='batch-based'):
    """Forward pass of GradientMatchingTerm (all scales in one pallas_call)."""
    num, den = _per_image_sums(prediction, target, mask, scales)
    if reduction == 'batch-based':
        num_tot = jnp.sum(num, axis=0)          # (scales,)
        den_tot = jnp.sum(den, axis=0)          # (scales,)
        per_scale = jnp.where(den_tot <= 1e-6, 0.0,
                              num_tot / jnp.maximum(den_tot, 1e-30))
    else:  # 'image-based'
        per_image = jnp.where(den > 1e-6, num / jnp.maximum(den, 1e-30), num)
        per_scale = jnp.mean(per_image, axis=0)
    return jnp.sum(per_scale)


# ---------------- pure-JAX reference (for correctness check) ----------------

def _gradient_loss_ref(pred, tgt, mask, reduction):
    M = jnp.maximum(jnp.sum(mask, (1, 2)), 1.0)
    diff = (pred - tgt) * mask
    gx = diff[:, :, 1:] - diff[:, :, :-1]
    mx = mask[:, :, 1:] * mask[:, :, :-1]
    gy = diff[:, 1:, :] - diff[:, :-1, :]
    my = mask[:, 1:, :] * mask[:, :-1, :]
    hx = jnp.where(jnp.abs(gx) < 1.0, 0.5 * gx ** 2, jnp.abs(gx) - 0.5) * mx
    hy = jnp.where(jnp.abs(gy) < 1.0, 0.5 * gy ** 2, jnp.abs(gy) - 0.5) * my
    il = jnp.sum(hx, (1, 2)) + jnp.sum(hy, (1, 2))
    if reduction == 'batch-based':
        div = jnp.sum(M)
        return jnp.where(div <= 1e-6, 0.0, jnp.sum(il) / div)
    return jnp.mean(jnp.where(M > 1e-6, il / M, il))


def gradient_matching_term_ref(prediction, target, mask, scales=4,
                               reduction='batch-based'):
    total = jnp.float32(0.0)
    for scale in range(scales):
        step = 2 ** scale
        total = total + _gradient_loss_ref(
            prediction[:, ::step, ::step],
            target[:, ::step, ::step],
            mask[:, ::step, ::step],
            reduction)
    return total


if __name__ == "__main__":
    key = jax.random.PRNGKey(0)

    def _check(B, H, W, tag):
        kp, kt, km = jax.random.split(jax.random.fold_in(key, H * 131 + W), 3)
        prediction = jax.random.normal(kp, (B, H, W), dtype=jnp.float32)
        target = jax.random.normal(kt, (B, H, W), dtype=jnp.float32)
        mask = (jax.random.uniform(km, (B, H, W)) > 0.3).astype(jnp.float32)
        for red in ('batch-based', 'image-based'):
            out = gradient_matching_term(prediction, target, mask,
                                         scales=4, reduction=red)
            out = jax.block_until_ready(out)
            ref = gradient_matching_term_ref(prediction, target, mask,
                                             scales=4, reduction=red)
            if not bool(jnp.allclose(out, ref, rtol=1e-3, atol=1e-3)):
                raise AssertionError(
                    f"{tag} {red} mismatch: pallas={out} ref={ref}")

    _check(2, 16, 16, "small")     # single-row-tile path
    _check(1, 256, 128, "tiled")   # H-tiled + halo path (2 row tiles, B=1)
    print("KERNEL_OK")
</pallas_src>

<mosaic_0001>
module attributes {stable_mosaic.version = 11 : i64} {
  func.func @_fused_grad_loss_kernel(%arg0: i32, %arg1: i32, %arg2: memref<1x16x16xf32, #tpu.memory_space<vmem>>, %arg3: memref<1x16x16xf32, #tpu.memory_space<vmem>>, %arg4: memref<1x16x16xf32, #tpu.memory_space<vmem>>, %arg5: memref<1x8x16xf32, #tpu.memory_space<vmem>>, %arg6: memref<1x8x16xf32, #tpu.memory_space<vmem>>, %arg7: memref<1x8x16xf32, #tpu.memory_space<vmem>>, %arg8: memref<1x1x128xf32, #tpu.memory_space<vmem>>) attributes {dimension_semantics = [#tpu.dimension_semantics<parallel>, #tpu.dimension_semantics<parallel>], iteration_bounds = array<i64: 2, 1>, scalar_prefetch = 0 : i64, scratch_operands = 0 : i64, tpu.core_type = #tpu.core_type<tc>, window_params = [{transform_indices = @transform_0, window_bounds = array<i64: 1, 16, 16>}, {transform_indices = @transform_1, window_bounds = array<i64: 1, 16, 16>}, {transform_indices = @transform_2, window_bounds = array<i64: 1, 16, 16>}, {transform_indices = @transform_3, window_bounds = array<i64: 1, 8, 16>}, {transform_indices = @transform_4, window_bounds = array<i64: 1, 8, 16>}, {transform_indices = @transform_5, window_bounds = array<i64: 1, 8, 16>}, {transform_indices = @transform_6, window_bounds = array<i64: 1, 1, 128>}]} {
    %c0 = arith.constant 0 : index
    %c0_0 = arith.constant 0 : index
    %c0_1 = arith.constant 0 : index
    %0 = vector.load %arg2[%c0, %c0_0, %c0_1] : memref<1x16x16xf32, #tpu.memory_space<vmem>>, vector<1x16x16xf32>
    %1 = vector.shape_cast %0 : vector<1x16x16xf32> to vector<16x16xf32>
    %c0_2 = arith.constant 0 : index
    %c0_3 = arith.constant 0 : index
    %c0_4 = arith.constant 0 : index
    %2 = vector.load %arg3[%c0_2, %c0_3, %c0_4] : memref<1x16x16xf32, #tpu.memory_space<vmem>>, vector<1x16x16xf32>
    %3 = vector.shape_cast %2 : vector<1x16x16xf32> to vector<16x16xf32>
    %c0_5 = arith.constant 0 : index
    %c0_6 = arith.constant 0 : index
    %c0_7 = arith.constant 0 : index
    %4 = vector.load %arg4[%c0_5, %c0_6, %c0_7] : memref<1x16x16xf32, #tpu.memory_space<vmem>>, vector<1x16x16xf32>
    %5 = vector.shape_cast %4 : vector<1x16x16xf32> to vector<16x16xf32>
    %c0_8 = arith.constant 0 : index
    %c0_9 = arith.constant 0 : index
    %c0_10 = arith.constant 0 : index
    %6 = vector.load %arg5[%c0_8, %c0_9, %c0_10] : memref<1x8x16xf32, #tpu.memory_space<vmem>>, vector<1x8x16xf32>
    %7 = vector.shape_cast %6 : vector<1x8x16xf32> to vector<8x16xf32>
    %c0_11 = arith.constant 0 : index
    %c0_12 = arith.constant 0 : index
    %c0_13 = arith.constant 0 : index
    %8 = vector.load %arg6[%c0_11, %c0_12, %c0_13] : memref<1x8x16xf32, #tpu.memory_space<vmem>>, vector<1x8x16xf32>
    %9 = vector.shape_cast %8 : vector<1x8x16xf32> to vector<8x16xf32>
    %c0_14 = arith.constant 0 : index
    %c0_15 = arith.constant 0 : index
    %c0_16 = arith.constant 0 : index
    %10 = vector.load %arg7[%c0_14, %c0_15, %c0_16] : memref<1x8x16xf32, #tpu.memory_space<vmem>>, vector<1x8x16xf32>
    %11 = vector.shape_cast %10 : vector<1x8x16xf32> to vector<8x16xf32>
    %12 = arith.subf %1, %3 : vector<16x16xf32>
    %13 = arith.mulf %12, %5 : vector<16x16xf32>
    %14 = arith.subf %7, %9 : vector<8x16xf32>
    %15 = arith.mulf %14, %11 : vector<8x16xf32>
    %16 = tpu.concatenate %13, %15 in 0 : vector<16x16xf32>, vector<8x16xf32> -> vector<24x16xf32>
    %17 = tpu.concatenate %5, %11 in 0 : vector<16x16xf32>, vector<8x16xf32> -> vector<24x16xf32>
    %18 = tpu.iota {dimensions = array<i32: 0>} : vector<24x1xi32>
    %c16_i32 = arith.constant 16 : i32
    %19 = arith.muli %arg1, %c16_i32 : i32
    %20 = vector.broadcast %19 : i32 to vector<24x1xi32>
    %21 = arith.addi %18, %20 : vector<24x1xi32>
    %22 = tpu.iota {dimensions = array<i32: 1>} : vector<1x16xi32>
    %23 = tpu.iota {dimensions = array<i32: 1>} : vector<1x128xi32>
    %c16_i32_17 = arith.constant 16 : i32
    %24 = vector.broadcast %c16_i32_17 : i32 to vector<24x1xi32>
    %25 = arith.cmpi slt, %18, %24 : vector<24x1xi32>
    %cst = arith.constant 0.000000e+00 : f32
    %26 = vector.broadcast %cst : f32 to vector<1x128xf32>
    %c15_i32 = arith.constant 15 : i32
    %27 = tpu.dynamic_rotate %16 by %c15_i32 dim 1 : vector<24x16xf32>, i32 -> vector<24x16xf32>
    %c15_i32_18 = arith.constant 15 : i32
    %28 = tpu.dynamic_rotate %17 by %c15_i32_18 dim 1 : vector<24x16xf32>, i32 -> vector<24x16xf32>
    %29 = arith.subf %27, %16 : vector<24x16xf32>
    %30 = math.absf %29 : vector<24x16xf32>
    %cst_19 = arith.constant 1.000000e+00 : f32
    %31 = vector.broadcast %cst_19 : f32 to vector<24x16xf32>
    %32 = arith.cmpf olt, %30, %31 : vector<24x16xf32>
    %cst_20 = arith.constant 5.000000e-01 : f32
    %33 = vector.broadcast %cst_20 : f32 to vector<24x16xf32>
    %34 = arith.mulf %33, %29 : vector<24x16xf32>
    %35 = arith.mulf %34, %29 : vector<24x16xf32>
    %cst_21 = arith.constant 5.000000e-01 : f32
    %36 = vector.broadcast %cst_21 : f32 to vector<24x16xf32>
    %37 = arith.subf %30, %36 : vector<24x16xf32>
    %38 = arith.select %32, %35, %37 : vector<24x16xi1>, vector<24x16xf32>
    %39 = arith.mulf %17, %28 : vector<24x16xf32>
    %40 = arith.mulf %38, %39 : vector<24x16xf32>
    %c1_i32 = arith.constant 1 : i32
    %41 = vector.broadcast %c1_i32 : i32 to vector<1x16xi32>
    %42 = arith.addi %22, %41 : vector<1x16xi32>
    %c16_i32_22 = arith.constant 16 : i32
    %43 = vector.broadcast %c16_i32_22 : i32 to vector<1x16xi32>
    %44 = arith.cmpi slt, %42, %43 : vector<1x16xi32>
    %cst_23 = arith.constant 0.000000e+00 : f32
    %45 = vector.shape_cast %44 : vector<1x16xi1> to vector<1x16xi1>
    %46 = vector.broadcast %45 : vector<1x16xi1> to vector<24x16xi1>
    %47 = vector.broadcast %cst_23 : f32 to vector<24x16xf32>
    %48 = arith.select %46, %40, %47 : vector<24x16xi1>, vector<24x16xf32>
    %cst_24 = arith.constant 0.000000e+00 : f32
    %49 = vector.shape_cast %25 : vector<24x1xi1> to vector<24x1xi1>
    %50 = vector.broadcast %49 : vector<24x1xi1> to vector<24x16xi1>
    %51 = vector.broadcast %cst_24 : f32 to vector<24x16xf32>
    %52 = arith.select %50, %48, %51 : vector<24x16xi1>, vector<24x16xf32>
    %53 = vector.shape_cast %52 : vector<24x16xf32> to vector<1x24x16xf32>
    %cst_25 = arith.constant dense<0.000000e+00> : vector<1xf32>
    %54 = vector.multi_reduction <add>, %53, %cst_25 [1, 2] : vector<1x24x16xf32> to vector<1xf32>
    %55 = vector.shape_cast %54 : vector<1xf32> to vector<1x1x1xf32>
    %56 = vector.extract %55[0, 0, 0] : f32 from vector<1x1x1xf32>
    %cst_26 = arith.constant 0.000000e+00 : f32
    %57 = arith.addf %cst_26, %56 : f32
    %c23_i32 = arith.constant 23 : i32
    %58 = tpu.dynamic_rotate %16 by %c23_i32 dim 0 : vector<24x16xf32>, i32 -> vector<24x16xf32>
    %c23_i32_27 = arith.constant 23 : i32
    %59 = tpu.dynamic_rotate %17 by %c23_i32_27 dim 0 : vector<24x16xf32>, i32 -> vector<24x16xf32>
    %60 = arith.subf %58, %16 : vector<24x16xf32>
    %61 = math.absf %60 : vector<24x16xf32>
    %cst_28 = arith.constant 1.000000e+00 : f32
    %62 = vector.broadcast %cst_28 : f32 to vector<24x16xf32>
    %63 = arith.cmpf olt, %61, %62 : vector<24x16xf32>
    %cst_29 = arith.constant 5.000000e-01 : f32
    %64 = vector.broadcast %cst_29 : f32 to vector<24x16xf32>
    %65 = arith.mulf %64, %60 : vector<24x16xf32>
    %66 = arith.mulf %65, %60 : vector<24x16xf32>
    %cst_30 = arith.constant 5.000000e-01 : f32
    %67 = vector.broadcast %cst_30 : f32 to vector<24x16xf32>
    %68 = arith.subf %61, %67 : vector<24x16xf32>
    %69 = arith.select %63, %66, %68 : vector<24x16xi1>, vector<24x16xf32>
    %70 = arith.mulf %17, %59 : vector<24x16xf32>
    %71 = arith.mulf %69, %70 : vector<24x16xf32>
    %c1_i32_31 = arith.constant 1 : i32
    %72 = vector.broadcast %c1_i32_31 : i32 to vector<24x1xi32>
    %73 = arith.addi %21, %72 : vector<24x1xi32>
    %c16_i32_32 = arith.constant 16 : i32
    %74 = vector.broadcast %c16_i32_32 : i32 to vector<24x1xi32>
    %75 = arith.cmpi slt, %73, %74 : vector<24x1xi32>
    %76 = arith.andi %25, %75 : vector<24x1xi1>
    %cst_33 = arith.constant 0.000000e+00 : f32
    %77 = vector.shape_cast %76 : vector<24x1xi1> to vector<24x1xi1>
    %78 = vector.broadcast %77 : vector<24x1xi1> to vector<24x16xi1>
    %79 = vector.broadcast %cst_33 : f32 to vector<24x16xf32>
    %80 = arith.select %78, %71, %79 : vector<24x16xi1>, vector<24x16xf32>
    %81 = vector.shape_cast %80 : vector<24x16xf32> to vector<1x24x16xf32>
    %cst_34 = arith.constant dense<0.000000e+00> : vector<1xf32>
    %82 = vector.multi_reduction <add>, %81, %cst_34 [1, 2] : vector<1x24x16xf32> to vector<1xf32>
    %83 = vector.shape_cast %82 : vector<1xf32> to vector<1x1x1xf32>
    %84 = vector.extract %83[0, 0, 0] : f32 from vector<1x1x1xf32>
    %85 = arith.addf %57, %84 : f32
    %cst_35 = arith.constant 0.000000e+00 : f32
    %86 = vector.shape_cast %25 : vector<24x1xi1> to vector<24x1xi1>
    %87 = vector.broadcast %86 : vector<24x1xi1> to vector<24x16xi1>
    %88 = vector.broadcast %cst_35 : f32 to vector<24x16xf32>
    %89 = arith.select %87, %17, %88 : vector<24x16xi1>, vector<24x16xf32>
    %90 = vector.shape_cast %89 : vector<24x16xf32> to vector<1x24x16xf32>
    %cst_36 = arith.constant dense<0.000000e+00> : vector<1xf32>
    %91 = vector.multi_reduction <add>, %90, %cst_36 [1, 2] : vector<1x24x16xf32> to vector<1xf32>
    %92 = vector.shape_cast %91 : vector<1xf32> to vector<1x1x1xf32>
    %93 = vector.extract %92[0, 0, 0] : f32 from vector<1x1x1xf32>
    %c0_i32 = arith.constant 0 : i32
    %94 = vector.broadcast %c0_i32 : i32 to vector<1x128xi32>
    %95 = arith.cmpi eq, %23, %94 : vector<1x128xi32>
    %96 = vector.broadcast %85 : f32 to vector<1x128xf32>
    %97 = arith.select %95, %96, %26 : vector<1x128xi1>, vector<1x128xf32>
    %c4_i32 = arith.constant 4 : i32
    %98 = vector.broadcast %c4_i32 : i32 to vector<1x128xi32>
    %99 = arith.cmpi eq, %23, %98 : vector<1x128xi32>
    %100 = vector.broadcast %93 : f32 to vector<1x128xf32>
    %101 = arith.select %99, %100, %97 : vector<1x128xi1>, vector<1x128xf32>
    %c1_i32_37 = arith.constant 1 : i32
    %102 = vector.broadcast %c1_i32_37 : i32 to vector<24x1xi32>
    %103 = arith.andi %21, %102 : vector<24x1xi32>
    %c0_i32_38 = arith.constant 0 : i32
    %104 = vector.broadcast %c0_i32_38 : i32 to vector<24x1xi32>
    %105 = arith.cmpi eq, %103, %104 : vector<24x1xi32>
    %106 = arith.andi %25, %105 : vector<24x1xi1>
    %c1_i32_39 = arith.constant 1 : i32
    %107 = vector.broadcast %c1_i32_39 : i32 to vector<1x16xi32>
    %108 = arith.andi %22, %107 : vector<1x16xi32>
    %c0_i32_40 = arith.constant 0 : i32
    %109 = vector.broadcast %c0_i32_40 : i32 to vector<1x16xi32>
    %110 = arith.cmpi eq, %108, %109 : vector<1x16xi32>
    %c14_i32 = arith.constant 14 : i32
    %111 = tpu.dynamic_rotate %16 by %c14_i32 dim 1 : vector<24x16xf32>, i32 -> vector<24x16xf32>
    %c14_i32_41 = arith.constant 14 : i32
    %112 = tpu.dynamic_rotate %17 by %c14_i32_41 dim 1 : vector<24x16xf32>, i32 -> vector<24x16xf32>
    %113 = arith.subf %111, %16 : vector<24x16xf32>
    %114 = math.absf %113 : vector<24x16xf32>
    %cst_42 = arith.constant 1.000000e+00 : f32
    %115 = vector.broadcast %cst_42 : f32 to vector<24x16xf32>
    %116 = arith.cmpf olt, %114, %115 : vector<24x16xf32>
    %cst_43 = arith.constant 5.000000e-01 : f32
    %117 = vector.broadcast %cst_43 : f32 to vector<24x16xf32>
    %118 = arith.mulf %117, %113 : vector<24x16xf32>
    %119 = arith.mulf %118, %113 : vector<24x16xf32>
    %cst_44 = arith.constant 5.000000e-01 : f32
    %120 = vector.broadcast %cst_44 : f32 to vector<24x16xf32>
    %121 = arith.subf %114, %120 : vector<24x16xf32>
    %122 = arith.select %116, %119, %121 : vector<24x16xi1>, vector<24x16xf32>
    %123 = arith.mulf %17, %112 : vector<24x16xf32>
    %124 = arith.mulf %122, %123 : vector<24x16xf32>
    %c2_i32 = arith.constant 2 : i32
    %125 = vector.broadcast %c2_i32 : i32 to vector<1x16xi32>
    %126 = arith.addi %22, %125 : vector<1x16xi32>
    %c16_i32_45 = arith.constant 16 : i32
    %127 = vector.broadcast %c16_i32_45 : i32 to vector<1x16xi32>
    %128 = arith.cmpi slt, %126, %127 : vector<1x16xi32>
    %129 = arith.andi %128, %110 : vector<1x16xi1>
    %cst_46 = arith.constant 0.000000e+00 : f32
    %130 = vector.shape_cast %129 : vector<1x16xi1> to vector<1x16xi1>
    %131 = vector.broadcast %130 : vector<1x16xi1> to vector<24x16xi1>
    %132 = vector.broadcast %cst_46 : f32 to vector<24x16xf32>
    %133 = arith.select %131, %124, %132 : vector<24x16xi1>, vector<24x16xf32>
    %cst_47 = arith.constant 0.000000e+00 : f32
    %134 = vector.shape_cast %106 : vector<24x1xi1> to vector<24x1xi1>
    %135 = vector.broadcast %134 : vector<24x1xi1> to vector<24x16xi1>
    %136 = vector.broadcast %cst_47 : f32 to vector<24x16xf32>
    %137 = arith.select %135, %133, %136 : vector<24x16xi1>, vector<24x16xf32>
    %138 = vector.shape_cast %137 : vector<24x16xf32> to vector<1x24x16xf32>
    %cst_48 = arith.constant dense<0.000000e+00> : vector<1xf32>
    %139 = vector.multi_reduction <add>, %138, %cst_48 [1, 2] : vector<1x24x16xf32> to vector<1xf32>
    %140 = vector.shape_cast %139 : vector<1xf32> to vector<1x1x1xf32>
    %141 = vector.extract %140[0, 0, 0] : f32 from vector<1x1x1xf32>
    %cst_49 = arith.constant 0.000000e+00 : f32
    %142 = arith.addf %cst_49, %141 : f32
    %c22_i32 = arith.constant 22 : i32
    %143 = tpu.dynamic_rotate %16 by %c22_i32 dim 0 : vector<24x16xf32>, i32 -> vector<24x16xf32>
    %c22_i32_50 = arith.constant 22 : i32
    %144 = tpu.dynamic_rotate %17 by %c22_i32_50 dim 0 : vector<24x16xf32>, i32 -> vector<24x16xf32>
    %145 = arith.subf %143, %16 : vector<24x16xf32>
    %146 = math.absf %145 : vector<24x16xf32>
    %cst_51 = arith.constant 1.000000e+00 : f32
    %147 = vector.broadcast %cst_51 : f32 to vector<24x16xf32>
    %148 = arith.cmpf olt, %146, %147 : vector<24x16xf32>
    %cst_52 = arith.constant 5.000000e-01 : f32
    %149 = vector.broadcast %cst_52 : f32 to vector<24x16xf32>
    %150 = arith.mulf %149, %145 : vector<24x16xf32>
    %151 = arith.mulf %150, %145 : vector<24x16xf32>
    %cst_53 = arith.constant 5.000000e-01 : f32
    %152 = vector.broadcast %cst_53 : f32 to vector<24x16xf32>
    %153 = arith.subf %146, %152 : vector<24x16xf32>
    %154 = arith.select %148, %151, %153 : vector<24x16xi1>, vector<24x16xf32>
    %155 = arith.mulf %17, %144 : vector<24x16xf32>
    %156 = arith.mulf %154, %155 : vector<24x16xf32>
    %c2_i32_54 = arith.constant 2 : i32
    %157 = vector.broadcast %c2_i32_54 : i32 to vector<24x1xi32>
    %158 = arith.addi %21, %157 : vector<24x1xi32>
    %c16_i32_55 = arith.constant 16 : i32
    %159 = vector.broadcast %c16_i32_55 : i32 to vector<24x1xi32>
    %160 = arith.cmpi slt, %158, %159 : vector<24x1xi32>
    %161 = arith.andi %106, %160 : vector<24x1xi1>
    %cst_56 = arith.constant 0.000000e+00 : f32
    %162 = vector.shape_cast %161 : vector<24x1xi1> to vector<24x1xi1>
    %163 = vector.broadcast %162 : vector<24x1xi1> to vector<24x16xi1>
    %164 = vector.broadcast %cst_56 : f32 to vector<24x16xf32>
    %165 = arith.select %163, %156, %164 : vector<24x16xi1>, vector<24x16xf32>
    %cst_57 = arith.constant 0.000000e+00 : f32
    %166 = vector.shape_cast %110 : vector<1x16xi1> to vector<1x16xi1>
    %167 = vector.broadcast %166 : vector<1x16xi1> to vector<24x16xi1>
    %168 = vector.broadcast %cst_57 : f32 to vector<24x16xf32>
    %169 = arith.select %167, %165, %168 : vector<24x16xi1>, vector<24x16xf32>
    %170 = vector.shape_cast %169 : vector<24x16xf32> to vector<1x24x16xf32>
    %cst_58 = arith.constant dense<0.000000e+00> : vector<1xf32>
    %171 = vector.multi_reduction <add>, %170, %cst_58 [1, 2] : vector<1x24x16xf32> to vector<1xf32>
    %172 = vector.shape_cast %171 : vector<1xf32> to vector<1x1x1xf32>
    %173 = vector.extract %172[0, 0, 0] : f32 from vector<1x1x1xf32>
    %174 = arith.addf %142, %173 : f32
    %cst_59 = arith.constant 0.000000e+00 : f32
    %175 = vector.shape_cast %106 : vector<24x1xi1> to vector<24x1xi1>
    %176 = vector.broadcast %175 : vector<24x1xi1> to vector<24x16xi1>
    %177 = vector.broadcast %cst_59 : f32 to vector<24x16xf32>
    %178 = arith.select %176, %17, %177 : vector<24x16xi1>, vector<24x16xf32>
    %cst_60 = arith.constant 0.000000e+00 : f32
    %179 = vector.shape_cast %110 : vector<1x16xi1> to vector<1x16xi1>
    %180 = vector.broadcast %179 : vector<1x16xi1> to vector<24x16xi1>
    %181 = vector.broadcast %cst_60 : f32 to vector<24x16xf32>
    %182 = arith.select %180, %178, %181 : vector<24x16xi1>, vector<24x16xf32>
    %183 = vector.shape_cast %182 : vector<24x16xf32> to vector<1x24x16xf32>
    %cst_61 = arith.constant dense<0.000000e+00> : vector<1xf32>
    %184 = vector.multi_reduction <add>, %183, %cst_61 [1, 2] : vector<1x24x16xf32> to vector<1xf32>
    %185 = vector.shape_cast %184 : vector<1xf32> to vector<1x1x1xf32>
    %186 = vector.extract %185[0, 0, 0] : f32 from vector<1x1x1xf32>
    %c1_i32_62 = arith.constant 1 : i32
    %187 = vector.broadcast %c1_i32_62 : i32 to vector<1x128xi32>
    %188 = arith.cmpi eq, %23, %187 : vector<1x128xi32>
    %189 = vector.broadcast %174 : f32 to vector<1x128xf32>
    %190 = arith.select %188, %189, %101 : vector<1x128xi1>, vector<1x128xf32>
    %c5_i32 = arith.constant 5 : i32
    %191 = vector.broadcast %c5_i32 : i32 to vector<1x128xi32>
    %192 = arith.cmpi eq, %23, %191 : vector<1x128xi32>
    %193 = vector.broadcast %186 : f32 to vector<1x128xf32>
    %194 = arith.select %192, %193, %190 : vector<1x128xi1>, vector<1x128xf32>
    %c3_i32 = arith.constant 3 : i32
    %195 = vector.broadcast %c3_i32 : i32 to vector<24x1xi32>
    %196 = arith.andi %21, %195 : vector<24x1xi32>
    %c0_i32_63 = arith.constant 0 : i32
    %197 = vector.broadcast %c0_i32_63 : i32 to vector<24x1xi32>
    %198 = arith.cmpi eq, %196, %197 : vector<24x1xi32>
    %199 = arith.andi %25, %198 : vector<24x1xi1>
    %c3_i32_64 = arith.constant 3 : i32
    %200 = vector.broadcast %c3_i32_64 : i32 to vector<1x16xi32>
    %201 = arith.andi %22, %200 : vector<1x16xi32>
    %c0_i32_65 = arith.constant 0 : i32
    %202 = vector.broadcast %c0_i32_65 : i32 to vector<1x16xi32>
    %203 = arith.cmpi eq, %201, %202 : vector<1x16xi32>
    %c12_i32 = arith.constant 12 : i32
    %204 = tpu.dynamic_rotate %16 by %c12_i32 dim 1 : vector<24x16xf32>, i32 -> vector<24x16xf32>
    %c12_i32_66 = arith.constant 12 : i32
    %205 = tpu.dynamic_rotate %17 by %c12_i32_66 dim 1 : vector<24x16xf32>, i32 -> vector<24x16xf32>
    %206 = arith.subf %204, %16 : vector<24x16xf32>
    %207 = math.absf %206 : vector<24x16xf32>
    %cst_67 = arith.constant 1.000000e+00 : f32
    %208 = vector.broadcast %cst_67 : f32 to vector<24x16xf32>
    %209 = arith.cmpf olt, %207, %208 : vector<24x16xf32>
    %cst_68 = arith.constant 5.000000e-01 : f32
    %210 = vector.broadcast %cst_68 : f32 to vector<24x16xf32>
    %211 = arith.mulf %210, %206 : vector<24x16xf32>
    %212 = arith.mulf %211, %206 : vector<24x16xf32>
    %cst_69 = arith.constant 5.000000e-01 : f32
    %213 = vector.broadcast %cst_69 : f32 to vector<24x16xf32>
    %214 = arith.subf %207, %213 : vector<24x16xf32>
    %215 = arith.select %209, %212, %214 : vector<24x16xi1>, vector<24x16xf32>
    %216 = arith.mulf %17, %205 : vector<24x16xf32>
    %217 = arith.mulf %215, %216 : vector<24x16xf32>
    %c4_i32_70 = arith.constant 4 : i32
    %218 = vector.broadcast %c4_i32_70 : i32 to vector<1x16xi32>
    %219 = arith.addi %22, %218 : vector<1x16xi32>
    %c16_i32_71 = arith.constant 16 : i32
    %220 = vector.broadcast %c16_i32_71 : i32 to vector<1x16xi32>
    %221 = arith.cmpi slt, %219, %220 : vector<1x16xi32>
    %222 = arith.andi %221, %203 : vector<1x16xi1>
    %cst_72 = arith.constant 0.000000e+00 : f32
    %223 = vector.shape_cast %222 : vector<1x16xi1> to vector<1x16xi1>
    %224 = vector.broadcast %223 : vector<1x16xi1> to vector<24x16xi1>
    %225 = vector.broadcast %cst_72 : f32 to vector<24x16xf32>
    %226 = arith.select %224, %217, %225 : vector<24x16xi1>, vector<24x16xf32>
    %cst_73 = arith.constant 0.000000e+00 : f32
    %227 = vector.shape_cast %199 : vector<24x1xi1> to vector<24x1xi1>
    %228 = vector.broadcast %227 : vector<24x1xi1> to vector<24x16xi1>
    %229 = vector.broadcast %cst_73 : f32 to vector<24x16xf32>
    %230 = arith.select %228, %226, %229 : vector<24x16xi1>, vector<24x16xf32>
    %231 = vector.shape_cast %230 : vector<24x16xf32> to vector<1x24x16xf32>
    %cst_74 = arith.constant dense<0.000000e+00> : vector<1xf32>
    %232 = vector.multi_reduction <add>, %231, %cst_74 [1, 2] : vector<1x24x16xf32> to vector<1xf32>
    %233 = vector.shape_cast %232 : vector<1xf32> to vector<1x1x1xf32>
    %234 = vector.extract %233[0, 0, 0] : f32 from vector<1x1x1xf32>
    %cst_75 = arith.constant 0.000000e+00 : f32
    %235 = arith.addf %cst_75, %234 : f32
    %c20_i32 = arith.constant 20 : i32
    %236 = tpu.dynamic_rotate %16 by %c20_i32 dim 0 : vector<24x16xf32>, i32 -> vector<24x16xf32>
    %c20_i32_76 = arith.constant 20 : i32
    %237 = tpu.dynamic_rotate %17 by %c20_i32_76 dim 0 : vector<24x16xf32>, i32 -> vector<24x16xf32>
    %238 = arith.subf %236, %16 : vector<24x16xf32>
    %239 = math.absf %238 : vector<24x16xf32>
    %cst_77 = arith.constant 1.000000e+00 : f32
    %240 = vector.broadcast %cst_77 : f32 to vector<24x16xf32>
    %241 = arith.cmpf olt, %239, %240 : vector<24x16xf32>
    %cst_78 = arith.constant 5.000000e-01 : f32
    %242 = vector.broadcast %cst_78 : f32 to vector<24x16xf32>
    %243 = arith.mulf %242, %238 : vector<24x16xf32>
    %244 = arith.mulf %243, %238 : vector<24x16xf32>
    %cst_79 = arith.constant 5.000000e-01 : f32
    %245 = vector.broadcast %cst_79 : f32 to vector<24x16xf32>
    %246 = arith.subf %239, %245 : vector<24x16xf32>
    %247 = arith.select %241, %244, %246 : vector<24x16xi1>, vector<24x16xf32>
    %248 = arith.mulf %17, %237 : vector<24x16xf32>
    %249 = arith.mulf %247, %248 : vector<24x16xf32>
    %c4_i32_80 = arith.constant 4 : i32
    %250 = vector.broadcast %c4_i32_80 : i32 to vector<24x1xi32>
    %251 = arith.addi %21, %250 : vector<24x1xi32>
    %c16_i32_81 = arith.constant 16 : i32
    %252 = vector.broadcast %c16_i32_81 : i32 to vector<24x1xi32>
    %253 = arith.cmpi slt, %251, %252 : vector<24x1xi32>
    %254 = arith.andi %199, %253 : vector<24x1xi1>
    %cst_82 = arith.constant 0.000000e+00 : f32
    %255 = vector.shape_cast %254 : vector<24x1xi1> to vector<24x1xi1>
    %256 = vector.broadcast %255 : vector<24x1xi1> to vector<24x16xi1>
    %257 = vector.broadcast %cst_82 : f32 to vector<24x16xf32>
    %258 = arith.select %256, %249, %257 : vector<24x16xi1>, vector<24x16xf32>
    %cst_83 = arith.constant 0.000000e+00 : f32
    %259 = vector.shape_cast %203 : vector<1x16xi1> to vector<1x16xi1>
    %260 = vector.broadcast %259 : vector<1x16xi1> to vector<24x16xi1>
    %261 = vector.broadcast %cst_83 : f32 to vector<24x16xf32>
    %262 = arith.select %260, %258, %261 : vector<24x16xi1>, vector<24x16xf32>
    %263 = vector.shape_cast %262 : vector<24x16xf32> to vector<1x24x16xf32>
    %cst_84 = arith.constant dense<0.000000e+00> : vector<1xf32>
    %264 = vector.multi_reduction <add>, %263, %cst_84 [1, 2] : vector<1x24x16xf32> to vector<1xf32>
    %265 = vector.shape_cast %264 : vector<1xf32> to vector<1x1x1xf32>
    %266 = vector.extract %265[0, 0, 0] : f32 from vector<1x1x1xf32>
    %267 = arith.addf %235, %266 : f32
    %cst_85 = arith.constant 0.000000e+00 : f32
    %268 = vector.shape_cast %199 : vector<24x1xi1> to vector<24x1xi1>
    %269 = vector.broadcast %268 : vector<24x1xi1> to vector<24x16xi1>
    %270 = vector.broadcast %cst_85 : f32 to vector<24x16xf32>
    %271 = arith.select %269, %17, %270 : vector<24x16xi1>, vector<24x16xf32>
    %cst_86 = arith.constant 0.000000e+00 : f32
    %272 = vector.shape_cast %203 : vector<1x16xi1> to vector<1x16xi1>
    %273 = vector.broadcast %272 : vector<1x16xi1> to vector<24x16xi1>
    %274 = vector.broadcast %cst_86 : f32 to vector<24x16xf32>
    %275 = arith.select %273, %271, %274 : vector<24x16xi1>, vector<24x16xf32>
    %276 = vector.shape_cast %275 : vector<24x16xf32> to vector<1x24x16xf32>
    %cst_87 = arith.constant dense<0.000000e+00> : vector<1xf32>
    %277 = vector.multi_reduction <add>, %276, %cst_87 [1, 2] : vector<1x24x16xf32> to vector<1xf32>
    %278 = vector.shape_cast %277 : vector<1xf32> to vector<1x1x1xf32>
    %279 = vector.extract %278[0, 0, 0] : f32 from vector<1x1x1xf32>
    %c2_i32_88 = arith.constant 2 : i32
    %280 = vector.broadcast %c2_i32_88 : i32 to vector<1x128xi32>
    %281 = arith.cmpi eq, %23, %280 : vector<1x128xi32>
    %282 = vector.broadcast %267 : f32 to vector<1x128xf32>
    %283 = arith.select %281, %282, %194 : vector<1x128xi1>, vector<1x128xf32>
    %c6_i32 = arith.constant 6 : i32
    %284 = vector.broadcast %c6_i32 : i32 to vector<1x128xi32>
    %285 = arith.cmpi eq, %23, %284 : vector<1x128xi32>
    %286 = vector.broadcast %279 : f32 to vector<1x128xf32>
    %287 = arith.select %285, %286, %283 : vector<1x128xi1>, vector<1x128xf32>
    %c7_i32 = arith.constant 7 : i32
    %288 = vector.broadcast %c7_i32 : i32 to vector<24x1xi32>
    %289 = arith.andi %21, %288 : vector<24x1xi32>
    %c0_i32_89 = arith.constant 0 : i32
    %290 = vector.broadcast %c0_i32_89 : i32 to vector<24x1xi32>
    %291 = arith.cmpi eq, %289, %290 : vector<24x1xi32>
    %292 = arith.andi %25, %291 : vector<24x1xi1>
    %c7_i32_90 = arith.constant 7 : i32
    %293 = vector.broadcast %c7_i32_90 : i32 to vector<1x16xi32>
    %294 = arith.andi %22, %293 : vector<1x16xi32>
    %c0_i32_91 = arith.constant 0 : i32
    %295 = vector.broadcast %c0_i32_91 : i32 to vector<1x16xi32>
    %296 = arith.cmpi eq, %294, %295 : vector<1x16xi32>
    %c8_i32 = arith.constant 8 : i32
    %297 = tpu.dynamic_rotate %16 by %c8_i32 dim 1 : vector<24x16xf32>, i32 -> vector<24x16xf32>
    %c8_i32_92 = arith.constant 8 : i32
    %298 = tpu.dynamic_rotate %17 by %c8_i32_92 dim 1 : vector<24x16xf32>, i32 -> vector<24x16xf32>
    %299 = arith.subf %297, %16 : vector<24x16xf32>
    %300 = math.absf %299 : vector<24x16xf32>
    %cst_93 = arith.constant 1.000000e+00 : f32
    %301 = vector.broadcast %cst_93 : f32 to vector<24x16xf32>
    %302 = arith.cmpf olt, %300, %301 : vector<24x16xf32>
    %cst_94 = arith.constant 5.000000e-01 : f32
    %303 = vector.broadcast %cst_94 : f32 to vector<24x16xf32>
    %304 = arith.mulf %303, %299 : vector<24x16xf32>
    %305 = arith.mulf %304, %299 : vector<24x16xf32>
    %cst_95 = arith.constant 5.000000e-01 : f32
    %306 = vector.broadcast %cst_95 : f32 to vector<24x16xf32>
    %307 = arith.subf %300, %306 : vector<24x16xf32>
    %308 = arith.select %302, %305, %307 : vector<24x16xi1>, vector<24x16xf32>
    %309 = arith.mulf %17, %298 : vector<24x16xf32>
    %310 = arith.mulf %308, %309 : vector<24x16xf32>
    %c8_i32_96 = arith.constant 8 : i32
    %311 = vector.broadcast %c8_i32_96 : i32 to vector<1x16xi32>
    %312 = arith.addi %22, %311 : vector<1x16xi32>
    %c16_i32_97 = arith.constant 16 : i32
    %313 = vector.broadcast %c16_i32_97 : i32 to vector<1x16xi32>
    %314 = arith.cmpi slt, %312, %313 : vector<1x16xi32>
    %315 = arith.andi %314, %296 : vector<1x16xi1>
    %cst_98 = arith.constant 0.000000e+00 : f32
    %316 = vector.shape_cast %315 : vector<1x16xi1> to vector<1x16xi1>
    %317 = vector.broadcast %316 : vector<1x16xi1> to vector<24x16xi1>
    %318 = vector.broadcast %cst_98 : f32 to vector<24x16xf32>
    %319 = arith.select %317, %310, %318 : vector<24x16xi1>, vector<24x16xf32>
    %cst_99 = arith.constant 0.000000e+00 : f32
    %320 = vector.shape_cast %292 : vector<24x1xi1> to vector<24x1xi1>
    %321 = vector.broadcast %320 : vector<24x1xi1> to vector<24x16xi1>
    %322 = vector.broadcast %cst_99 : f32 to vector<24x16xf32>
    %323 = arith.select %321, %319, %322 : vector<24x16xi1>, vector<24x16xf32>
    %324 = vector.shape_cast %323 : vector<24x16xf32> to vector<1x24x16xf32>
    %cst_100 = arith.constant dense<0.000000e+00> : vector<1xf32>
    %325 = vector.multi_reduction <add>, %324, %cst_100 [1, 2] : vector<1x24x16xf32> to vector<1xf32>
    %326 = vector.shape_cast %325 : vector<1xf32> to vector<1x1x1xf32>
    %327 = vector.extract %326[0, 0, 0] : f32 from vector<1x1x1xf32>
    %cst_101 = arith.constant 0.000000e+00 : f32
    %328 = arith.addf %cst_101, %327 : f32
    %c16_i32_102 = arith.constant 16 : i32
    %329 = tpu.dynamic_rotate %16 by %c16_i32_102 dim 0 : vector<24x16xf32>, i32 -> vector<24x16xf32>
    %c16_i32_103 = arith.constant 16 : i32
    %330 = tpu.dynamic_rotate %17 by %c16_i32_103 dim 0 : vector<24x16xf32>, i32 -> vector<24x16xf32>
    %331 = arith.subf %329, %16 : vector<24x16xf32>
    %332 = math.absf %331 : vector<24x16xf32>
    %cst_104 = arith.constant 1.000000e+00 : f32
    %333 = vector.broadcast %cst_104 : f32 to vector<24x16xf32>
    %334 = arith.cmpf olt, %332, %333 : vector<24x16xf32>
    %cst_105 = arith.constant 5.000000e-01 : f32
    %335 = vector.broadcast %cst_105 : f32 to vector<24x16xf32>
    %336 = arith.mulf %335, %331 : vector<24x16xf32>
    %337 = arith.mulf %336, %331 : vector<24x16xf32>
    %cst_106 = arith.constant 5.000000e-01 : f32
    %338 = vector.broadcast %cst_106 : f32 to vector<24x16xf32>
    %339 = arith.subf %332, %338 : vector<24x16xf32>
    %340 = arith.select %334, %337, %339 : vector<24x16xi1>, vector<24x16xf32>
    %341 = arith.mulf %17, %330 : vector<24x16xf32>
    %342 = arith.mulf %340, %341 : vector<24x16xf32>
    %c8_i32_107 = arith.constant 8 : i32
    %343 = vector.broadcast %c8_i32_107 : i32 to vector<24x1xi32>
    %344 = arith.addi %21, %343 : vector<24x1xi32>
    %c16_i32_108 = arith.constant 16 : i32
    %345 = vector.broadcast %c16_i32_108 : i32 to vector<24x1xi32>
    %346 = arith.cmpi slt, %344, %345 : vector<24x1xi32>
    %347 = arith.andi %292, %346 : vector<24x1xi1>
    %cst_109 = arith.constant 0.000000e+00 : f32
    %348 = vector.shape_cast %347 : vector<24x1xi1> to vector<24x1xi1>
    %349 = vector.broadcast %348 : vector<24x1xi1> to vector<24x16xi1>
    %350 = vector.broadcast %cst_109 : f32 to vector<24x16xf32>
    %351 = arith.select %349, %342, %350 : vector<24x16xi1>, vector<24x16xf32>
    %cst_110 = arith.constant 0.000000e+00 : f32
    %352 = vector.shape_cast %296 : vector<1x16xi1> to vector<1x16xi1>
    %353 = vector.broadcast %352 : vector<1x16xi1> to vector<24x16xi1>
    %354 = vector.broadcast %cst_110 : f32 to vector<24x16xf32>
    %355 = arith.select %353, %351, %354 : vector<24x16xi1>, vector<24x16xf32>
    %356 = vector.shape_cast %355 : vector<24x16xf32> to vector<1x24x16xf32>
    %cst_111 = arith.constant dense<0.000000e+00> : vector<1xf32>
    %357 = vector.multi_reduction <add>, %356, %cst_111 [1, 2] : vector<1x24x16xf32> to vector<1xf32>
    %358 = vector.shape_cast %357 : vector<1xf32> to vector<1x1x1xf32>
    %359 = vector.extract %358[0, 0, 0] : f32 from vector<1x1x1xf32>
    %360 = arith.addf %328, %359 : f32
    %cst_112 = arith.constant 0.000000e+00 : f32
    %361 = vector.shape_cast %292 : vector<24x1xi1> to vector<24x1xi1>
    %362 = vector.broadcast %361 : vector<24x1xi1> to vector<24x16xi1>
    %363 = vector.broadcast %cst_112 : f32 to vector<24x16xf32>
    %364 = arith.select %362, %17, %363 : vector<24x16xi1>, vector<24x16xf32>
    %cst_113 = arith.constant 0.000000e+00 : f32
    %365 = vector.shape_cast %296 : vector<1x16xi1> to vector<1x16xi1>
    %366 = vector.broadcast %365 : vector<1x16xi1> to vector<24x16xi1>
    %367 = vector.broadcast %cst_113 : f32 to vector<24x16xf32>
    %368 = arith.select %366, %364, %367 : vector<24x16xi1>, vector<24x16xf32>
    %369 = vector.shape_cast %368 : vector<24x16xf32> to vector<1x24x16xf32>
    %cst_114 = arith.constant dense<0.000000e+00> : vector<1xf32>
    %370 = vector.multi_reduction <add>, %369, %cst_114 [1, 2] : vector<1x24x16xf32> to vector<1xf32>
    %371 = vector.shape_cast %370 : vector<1xf32> to vector<1x1x1xf32>
    %372 = vector.extract %371[0, 0, 0] : f32 from vector<1x1x1xf32>
    %c3_i32_115 = arith.constant 3 : i32
    %373 = vector.broadcast %c3_i32_115 : i32 to vector<1x128xi32>
    %374 = arith.cmpi eq, %23, %373 : vector<1x128xi32>
    %375 = vector.broadcast %360 : f32 to vector<1x128xf32>
    %376 = arith.select %374, %375, %287 : vector<1x128xi1>, vector<1x128xf32>
    %c7_i32_116 = arith.constant 7 : i32
    %377 = vector.broadcast %c7_i32_116 : i32 to vector<1x128xi32>
    %378 = arith.cmpi eq, %23, %377 : vector<1x128xi32>
    %379 = vector.broadcast %372 : f32 to vector<1x128xf32>
    %380 = arith.select %378, %379, %376 : vector<1x128xi1>, vector<1x128xf32>
    %c0_117 = arith.constant 0 : index
    %c0_118 = arith.constant 0 : index
    %c0_119 = arith.constant 0 : index
    %381 = vector.load %arg8[%c0_117, %c0_118, %c0_119] : memref<1x1x128xf32, #tpu.memory_space<vmem>>, vector<1x1x128xf32>
    %382 = vector.shape_cast %381 : vector<1x1x128xf32> to vector<1x128xf32>
    %383 = vector.shape_cast %380 : vector<1x128xf32> to vector<1x1x128xf32>
    tpu.vector_store %arg8[%c0_117, %c0_118, %c0_119], %383 {strides = array<i32>} : memref<1x1x128xf32, #tpu.memory_space<vmem>>, vector<1x1x128xf32>,
    return
  }
  func.func @transform_0(%arg0: i32, %arg1: i32) -> (i32, i32, i32) {
    %c0_i32 = arith.constant 0 : i32
    %c0_i32_0 = arith.constant 0 : i32
    return %arg0, %arg1, %c0_i32 : i32, i32, i32
  }
  func.func @transform_1(%arg0: i32, %arg1: i32) -> (i32, i32, i32) {
    %c0_i32 = arith.constant 0 : i32
    %c0_i32_0 = arith.constant 0 : i32
    return %arg0, %arg1, %c0_i32 : i32, i32, i32
  }
  func.func @transform_2(%arg0: i32, %arg1: i32) -> (i32, i32, i32) {
    %c0_i32 = arith.constant 0 : i32
    %c0_i32_0 = arith.constant 0 : i32
    return %arg0, %arg1, %c0_i32 : i32, i32, i32
  }
  func.func @transform_3(%arg0: i32, %arg1: i32) -> (i32, i32, i32) {
    %c1_i32 = arith.constant 1 : i32
    %0 = arith.addi %arg1, %c1_i32 : i32
    %c0_i32 = arith.constant 0 : i32
    %1 = arith.minsi %0, %c0_i32 : i32
    %c2_i32 = arith.constant 2 : i32
    %2 = arith.muli %1, %c2_i32 : i32
    %c0_i32_0 = arith.constant 0 : i32
    %c0_i32_1 = arith.constant 0 : i32
    return %arg0, %2, %c0_i32_0 : i32, i32, i32
  }
  func.func @transform_4(%arg0: i32, %arg1: i32) -> (i32, i32, i32) {
    %c1_i32 = arith.constant 1 : i32
    %0 = arith.addi %arg1, %c1_i32 : i32
    %c0_i32 = arith.constant 0 : i32
    %1 = arith.minsi %0, %c0_i32 : i32
    %c2_i32 = arith.constant 2 : i32
    %2 = arith.muli %1, %c2_i32 : i32
    %c0_i32_0 = arith.constant 0 : i32
    %c0_i32_1 = arith.constant 0 : i32
    return %arg0, %2, %c0_i32_0 : i32, i32, i32
  }
  func.func @transform_5(%arg0: i32, %arg1: i32) -> (i32, i32, i32) {
    %c1_i32 = arith.constant 1 : i32
    %0 = arith.addi %arg1, %c1_i32 : i32
    %c0_i32 = arith.constant 0 : i32
    %1 = arith.minsi %0, %c0_i32 : i32
    %c2_i32 = arith.constant 2 : i32
    %2 = arith.muli %1, %c2_i32 : i32
    %c0_i32_0 = arith.constant 0 : i32
    %c0_i32_1 = arith.constant 0 : i32
    return %arg0, %2, %c0_i32_0 : i32, i32, i32
  }
  func.func @transform_6(%arg0: i32, %arg1: i32) -> (i32, i32, i32) {
    %c0_i32 = arith.constant 0 : i32
    %c0_i32_0 = arith.constant 0 : i32
    return %arg0, %c0_i32, %arg1 : i32, i32, i32
  }
}

</mosaic_0001>

<llo_original>
// kernel: tpu_custom_call.1
$region0: #{tpu_custom_call.1}
  #allocation0 [shape = 'u32[]', space=smem, size = 0x4, offset = 0x4, fixed_abs, tag = 'smem constant byte address 0x4 - core index']
  #allocation1 [shape = 'u32[72,128]{1,0:T(1,128)}', space=vmem, size = 0x9000, scoped, tag = 'internal scratch']
  %s0 = inlined_call_operand.hbm [shape: f32[2,16,16], index: 0, kind: input, shape index: {}]
  %s1 = inlined_call_operand.hbm [shape: f32[2,16,16], index: 1, kind: input, shape index: {}]
  %s2 = inlined_call_operand.hbm [shape: f32[2,16,16], index: 2, kind: input, shape index: {}]
  %s3 = inlined_call_operand.hbm [shape: f32[2,16,16], index: 3, kind: input, shape index: {}]
  %s4 = inlined_call_operand.hbm [shape: f32[2,16,16], index: 4, kind: input, shape index: {}]
  %s5 = inlined_call_operand.hbm [shape: f32[2,16,16], index: 5, kind: input, shape index: {}]
  %s6 = inlined_call_operand.hbm [shape: f32[2,1,128], index: 6, kind: output, shape index: {}]
  %s7 = sld [smem:[#allocation0]]
  $region81: #{tpu_custom_call.1} parent=0
    _
  %s9 = ssub.s32 1, %s7
  %s10 = scalar_select 0, %s9, %s7
  $region1: #{tpu_custom_call.1} parent=0
    #allocation2 [shape = 'u8[16384]{0}', space=vmem, size = 0x4000, scoped, tag = 'input window, operand 0']
    #allocation3 [shape = 's32[2]{0}', space=sflag, size = 0x8, scoped, tag = 'scoped memory for tpu_custom_call.1']
    #allocation4 [shape = 's32[2]{0}', space=sflag, size = 0x8, scoped, tag = 'scoped memory for tpu_custom_call.1']
    #allocation5 [shape = 'u8[16384]{0}', space=vmem, size = 0x4000, scoped, tag = 'input window, operand 1']
    #allocation6 [shape = 's32[2]{0}', space=sflag, size = 0x8, scoped, tag = 'scoped memory for tpu_custom_call.1']
    #allocation7 [shape = 'u8[16384]{0}', space=vmem, size = 0x4000, scoped, tag = 'input window, operand 2']
    #allocation8 [shape = 'u8[8192]{0}', space=vmem, size = 0x2000, scoped, tag = 'input window, operand 3']
    #allocation9 [shape = 's32[2]{0}', space=sflag, size = 0x8, scoped, tag = 'scoped memory for tpu_custom_call.1']
    #allocation10 [shape = 'u8[8192]{0}', space=vmem, size = 0x2000, scoped, tag = 'input window, operand 4']
    #allocation11 [shape = 'u8[8192]{0}', space=vmem, size = 0x2000, scoped, tag = 'input window, operand 5']
    #allocation12 [shape = 's32[2]{0}', space=sflag, size = 0x8, scoped, tag = 'scoped memory for tpu_custom_call.1']
    #allocation13 [shape = 'u8[1024]{0}', space=vmem, size = 0x400, scoped, tag = 'output window, operand 0']
    %11 = vsyncpa [#allocation3], 0
    %s12 = scalar_lea.sflag [#allocation3], 1
    %13 = vsyncpa %s12, 0
    %14 = vsyncpa [#allocation6], 0
    %s15 = scalar_lea.sflag [#allocation6], 1
    %16 = vsyncpa %s15, 0
    %17 = vsyncpa [#allocation9], 0
    %s18 = scalar_lea.sflag [#allocation9], 1
    %19 = vsyncpa %s18, 0
    %20 = vsyncpa [#allocation12], 0
    %s21 = scalar_lea.sflag [#allocation12], 1
    %22 = vsyncpa %s21, 0
    %23 = vsyncpa [#allocation4], 0
    %s24 = scalar_lea.sflag [#allocation4], 1
    %25 = vsyncpa %s24, 0
    loop: start=0, step=1, limit=4
    $region2: #{tpu_custom_call.1} parent=1 // loop_pre_header
      _
    $region3: #{tpu_custom_call.1} parent=1 // loop_header
      %s27 = sphi 0, %s31
      %p28 = scmp.ge.s32.totalorder %s27, 4
      %s34 = sphi 0, %s46
      %s35 = sphi 0, %s42
      %s36 = sphi 0, %s34
      %s37 = sphi 0, %s35
      %s38 = sphi 0, %s36
      %s39 = sphi 0, %s37
      %s51 = sphi 0, %s53
      %s54 = sphi 0, %s51
      %s55 = sphi 0, %s54
      %s71 = sphi 0, %s55
      %s79 = sphi 0, %s81
      %s82 = sphi 0, %s79
      %s83 = sphi 0, %s82
      %s99 = sphi 0, %s83
      %s107 = sphi 0, %s109
      %s110 = sphi 0, %s107
      %s111 = sphi 0, %s110
      %s127 = sphi 0, %s111
      %s143 = sphi 0, %s145
      %s146 = sphi 0, %s143
      %s147 = sphi 0, %s146
      %s163 = sphi 0, %s147
      %s179 = sphi 0, %s181
      %s182 = sphi 0, %s179
      %s183 = sphi 0, %s182
      %s199 = sphi 0, %s183
      %s215 = sphi 0, %s217
      %s218 = sphi 0, %s215
      %s219 = sphi 0, %s218
      %s235 = sphi 0, %s219
      %s243 = sphi 0, %s245
      %s246 = sphi 0, %s243
      %s247 = sphi 0, %s246
      %s263 = sphi 0, %s247
    $region4: #{tpu_custom_call.1} parent=1 // loop_header_branch
      %30 = sbr.rel (%p28) target = $region8
    $region5: #{tpu_custom_call.1} parent=1 // loop_body
      %s32 = ssub.s32 %s27, 1
      %s33 = ssub.s32 %s27, 2
      %s40 = sadd.s32 1, %s35
      %p41 = scmp.ge.s32.totalorder %s40, 1
      %s42 = scalar_select %p41, 0, %s40
      %s43 = sadd.s32 1, %s34
      %s44 = scalar_select %p41, %s43, %s34
      %p45 = scmp.ge.s32.totalorder %s44, 2
      %s46 = scalar_select %p45, 0, %s44
      %s47 = ssub.s32 %s34, %s46
      %s48 = ssub.s32 %s35, %s42
      %s49 = sor.u32 %s47, %s48
      %p50 = scmp.eq.s32.totalorder %s49, 0
      %s52 = sadd.s32 %s51, 1
      %s53 = scalar_select %p50, %s51, %s52
      %p56 = pneg %p50
      %p57 = scmp.eq.s32.totalorder %s27, 1
      %p58 = por %p56, %p57
      %p59 = scmp.ne.s32.totalorder %s51, %s54
      %p60 = scmp.eq.s32.totalorder %s27, 0
      %p61 = por %p59, %p60
      %p62 = scmp.ne.s32.totalorder %s51, %s54
      %p63 = scmp.eq.s32.totalorder %s32, 1
      %p64 = por %p62, %p63
      %p65 = scmp.ne.s32.totalorder %s54, %s55
      %p66 = scmp.eq.s32.totalorder %s32, 0
      %p67 = por %p65, %p66
      %p68 = scmp.ne.s32.totalorder %s54, %s55
      %p69 = scmp.eq.s32.totalorder %s33, 1
      %p70 = por %p68, %p69
      %p72 = scmp.ne.s32.totalorder %s55, %s71
      %p73 = scmp.eq.s32.totalorder %s33, 0
      %p74 = por %p72, %p73
      %s75 = ssub.s32 %s34, %s46
      %s76 = ssub.s32 %s35, %s42
      %s77 = sor.u32 %s75, %s76
      %p78 = scmp.eq.s32.totalorder %s77, 0
      %s80 = sadd.s32 %s79, 1
      %s81 = scalar_select %p78, %s79, %s80
      %p84 = pneg %p78
      %p85 = scmp.eq.s32.totalorder %s27, 1
      %p86 = por %p84, %p85
      %p87 = scmp.ne.s32.totalorder %s79, %s82
      %p88 = scmp.eq.s32.totalorder %s27, 0
      %p89 = por %p87, %p88
      %p90 = scmp.ne.s32.totalorder %s79, %s82
      %p91 = scmp.eq.s32.totalorder %s32, 1
      %p92 = por %p90, %p91
      %p93 = scmp.ne.s32.totalorder %s82, %s83
      %p94 = scmp.eq.s32.totalorder %s32, 0
      %p95 = por %p93, %p94
      %p96 = scmp.ne.s32.totalorder %s82, %s83
      %p97 = scmp.eq.s32.totalorder %s33, 1
      %p98 = por %p96, %p97
      %p100 = scmp.ne.s32.totalorder %s83, %s99
      %p101 = scmp.eq.s32.totalorder %s33, 0
      %p102 = por %p100, %p101
      %s103 = ssub.s32 %s34, %s46
      %s104 = ssub.s32 %s35, %s42
      %s105 = sor.u32 %s103, %s104
      %p106 = scmp.eq.s32.totalorder %s105, 0
      %s108 = sadd.s32 %s107, 1
      %s109 = scalar_select %p106, %s107, %s108
      %p112 = pneg %p106
      %p113 = scmp.eq.s32.totalorder %s27, 1
      %p114 = por %p112, %p113
      %p115 = scmp.ne.s32.totalorder %s107, %s110
      %p116 = scmp.eq.s32.totalorder %s27, 0
      %p117 = por %p115, %p116
      %p118 = scmp.ne.s32.totalorder %s107, %s110
      %p119 = scmp.eq.s32.totalorder %s32, 1
      %p120 = por %p118, %p119
      %p121 = scmp.ne.s32.totalorder %s110, %s111
      %p122 = scmp.eq.s32.totalorder %s32, 0
      %p123 = por %p121, %p122
      %p124 = scmp.ne.s32.totalorder %s110, %s111
      %p125 = scmp.eq.s32.totalorder %s33, 1
      %p126 = por %p124, %p125
      %p128 = scmp.ne.s32.totalorder %s111, %s127
      %p129 = scmp.eq.s32.totalorder %s33, 0
      %p130 = por %p128, %p129
      %s131 = sadd.s32 %s35, 1
      %p132 = scmp.lt.s32.totalorder %s131, 0
      %s133 = scalar_select %p132, %s131, 0
      %s134 = smul.u32 %s133, 2
      %s135 = sadd.s32 %s42, 1
      %p136 = scmp.lt.s32.totalorder %s135, 0
      %s137 = scalar_select %p136, %s135, 0
      %s138 = smul.u32 %s137, 2
      %s139 = ssub.s32 %s34, %s46
      %s140 = ssub.s32 %s134, %s138
      %s141 = sor.u32 %s139, %s140
      %p142 = scmp.eq.s32.totalorder %s141, 0
      %s144 = sadd.s32 %s143, 1
      %s145 = scalar_select %p142, %s143, %s144
      %p148 = pneg %p142
      %p149 = scmp.eq.s32.totalorder %s27, 1
      %p150 = por %p148, %p149
      %p151 = scmp.ne.s32.totalorder %s143, %s146
      %p152 = scmp.eq.s32.totalorder %s27, 0
      %p153 = por %p151, %p152
      %p154 = scmp.ne.s32.totalorder %s143, %s146
      %p155 = scmp.eq.s32.totalorder %s32, 1
      %p156 = por %p154, %p155
      %p157 = scmp.ne.s32.totalorder %s146, %s147
      %p158 = scmp.eq.s32.totalorder %s32, 0
      %p159 = por %p157, %p158
      %p160 = scmp.ne.s32.totalorder %s146, %s147
      %p161 = scmp.eq.s32.totalorder %s33, 1
      %p162 = por %p160, %p161
      %p164 = scmp.ne.s32.totalorder %s147, %s163
      %p165 = scmp.eq.s32.totalorder %s33, 0
      %p166 = por %p164, %p165
      %s167 = sadd.s32 %s35, 1
      %p168 = scmp.lt.s32.totalorder %s167, 0
      %s169 = scalar_select %p168, %s167, 0
      %s170 = smul.u32 %s169, 2
      %s171 = sadd.s32 %s42, 1
      %p172 = scmp.lt.s32.totalorder %s171, 0
      %s173 = scalar_select %p172, %s171, 0
      %s174 = smul.u32 %s173, 2
      %s175 = ssub.s32 %s34, %s46
      %s176 = ssub.s32 %s170, %s174
      %s177 = sor.u32 %s175, %s176
      %p178 = scmp.eq.s32.totalorder %s177, 0
      %s180 = sadd.s32 %s179, 1
      %s181 = scalar_select %p178, %s179, %s180
      %p184 = pneg %p178
      %p185 = scmp.eq.s32.totalorder %s27, 1
      %p186 = por %p184, %p185
      %p187 = scmp.ne.s32.totalorder %s179, %s182
      %p188 = scmp.eq.s32.totalorder %s27, 0
      %p189 = por %p187, %p188
      %p190 = scmp.ne.s32.totalorder %s179, %s182
      %p191 = scmp.eq.s32.totalorder %s32, 1
      %p192 = por %p190, %p191
      %p193 = scmp.ne.s32.totalorder %s182, %s183
      %p194 = scmp.eq.s32.totalorder %s32, 0
      %p195 = por %p193, %p194
      %p196 = scmp.ne.s32.totalorder %s182, %s183
      %p197 = scmp.eq.s32.totalorder %s33, 1
      %p198 = por %p196, %p197
      %p200 = scmp.ne.s32.totalorder %s183, %s199
      %p201 = scmp.eq.s32.totalorder %s33, 0
      %p202 = por %p200, %p201
      %s203 = sadd.s32 %s35, 1
      %p204 = scmp.lt.s32.totalorder %s203, 0
      %s205 = scalar_select %p204, %s203, 0
      %s206 = smul.u32 %s205, 2
      %s207 = sadd.s32 %s42, 1
      %p208 = scmp.lt.s32.totalorder %s207, 0
      %s209 = scalar_select %p208, %s207, 0
      %s210 = smul.u32 %s209, 2
      %s211 = ssub.s32 %s34, %s46
      %s212 = ssub.s32 %s206, %s210
      %s213 = sor.u32 %s211, %s212
      %p214 = scmp.eq.s32.totalorder %s213, 0
      %s216 = sadd.s32 %s215, 1
      %s217 = scalar_select %p214, %s215, %s216
      %p220 = pneg %p214
      %p221 = scmp.eq.s32.totalorder %s27, 1
      %p222 = por %p220, %p221
      %p223 = scmp.ne.s32.totalorder %s215, %s218
      %p224 = scmp.eq.s32.totalorder %s27, 0
      %p225 = por %p223, %p224
      %p226 = scmp.ne.s32.totalorder %s215, %s218
      %p227 = scmp.eq.s32.totalorder %s32, 1
      %p228 = por %p226, %p227
      %p229 = scmp.ne.s32.totalorder %s218, %s219
      %p230 = scmp.eq.s32.totalorder %s32, 0
      %p231 = por %p229, %p230
      %p232 = scmp.ne.s32.totalorder %s218, %s219
      %p233 = scmp.eq.s32.totalorder %s33, 1
      %p234 = por %p232, %p233
      %p236 = scmp.ne.s32.totalorder %s219, %s235
      %p237 = scmp.eq.s32.totalorder %s33, 0
      %p238 = por %p236, %p237
      %s239 = ssub.s32 %s34, %s46
      %s240 = ssub.s32 %s35, %s42
      %s241 = sor.u32 %s239, %s240
      %p242 = scmp.eq.s32.totalorder %s241, 0
      %s244 = sadd.s32 %s243, 1
      %s245 = scalar_select %p242, %s243, %s244
      %p248 = pneg %p242
      %p249 = scmp.eq.s32.totalorder %s27, 1
      %p250 = por %p248, %p249
      %p251 = scmp.ne.s32.totalorder %s243, %s246
      %p252 = scmp.eq.s32.totalorder %s27, 0
      %p253 = por %p251, %p252
      %p254 = scmp.ne.s32.totalorder %s243, %s246
      %p255 = scmp.eq.s32.totalorder %s32, 1
      %p256 = por %p254, %p255
      %p257 = scmp.ne.s32.totalorder %s246, %s247
      %p258 = scmp.eq.s32.totalorder %s32, 0
      %p259 = por %p257, %p258
      %p260 = scmp.ne.s32.totalorder %s246, %s247
      %p261 = scmp.eq.s32.totalorder %s33, 1
      %p262 = por %p260, %p261
      %p264 = scmp.ne.s32.totalorder %s247, %s263
      %p265 = scmp.eq.s32.totalorder %s33, 0
      %p266 = por %p264, %p265
      %p267 = scmp.le.s32.totalorder 1, %s27
      %p268 = scmp.lt.s32.totalorder %s27, 3
      %p269 = pnand %p267, %p268
      %p270 = pneg %p269
      // Predicated region
      $region9: #{tpu_custom_call.1} parent=5 // pred_check
        _
      $region10: #{tpu_custom_call.1} parent=5 // pred_check_branch
        %272 = sbr.rel (%p269) target = $region12
      $region11: #{tpu_custom_call.1} parent=5 // pred_region
        %s273 = ssub.s32 %s27, 1
      $region12: #{tpu_custom_call.1} parent=5 // pred_fallthru
        _
      %p274 = scmp.lt.s32.totalorder %s27, 2
      // Predicated region
      $region13: #{tpu_custom_call.1} parent=5 // pred_check
        %p275 = pneg %p274
      $region14: #{tpu_custom_call.1} parent=5 // pred_check_branch
        %277 = sbr.rel (%p275) target = $region16
      $region15: #{tpu_custom_call.1} parent=5 // pred_region
        // Predicated region
        $region17: #{tpu_custom_call.1} parent=15 // pred_check
          %p278 = pneg %p61
        $region18: #{tpu_custom_call.1} parent=15 // pred_check_branch
          %280 = sbr.rel (%p278) target = $region20
        $region19: #{tpu_custom_call.1} parent=15 // pred_region
          %s281 = sand.u32 %s51, 1
          %s282 = scalar_lea.sflag [#allocation3], %s281
          %s283 = sand.u32 %s51, 1
          %s284 = smul.addr %s283, 16
          %s285 = scalar_lea.vmem [#allocation2], %s284
          %s286 = smul.u32 2, %s35
          %288 = vsyncadd %s282, 0
          %s289 = smul.addr %s34, 2
          %s290 = sadd.s32 %s286, %s289
          %s291 = smul.addr %s290, 8
          %s292 = scalar_lea.hbm %s0, %s291
          %s293 = sshll.u32 %s292, 4
          %s294 = int_to_ptr.hbm [resolvable:$true] %s293
          %s295 = sshll.u32 %s285, 4
          %s296 = int_to_ptr.vmem [resolvable:$true] %s295
          %301 = dma.hbm_to_vmem [thread:$0]  %s294, 256, %s296, %s282, 128, 128, 8
        $region20: #{tpu_custom_call.1} parent=15 // pred_fallthru
          _
        // Predicated region
        $region21: #{tpu_custom_call.1} parent=15 // pred_check
          %p302 = pneg %p89
        $region22: #{tpu_custom_call.1} parent=15 // pred_check_branch
          %304 = sbr.rel (%p302) target = $region24
        $region23: #{tpu_custom_call.1} parent=15 // pred_region
          %s305 = sand.u32 %s27, 1
          %s306 = scalar_lea.sflag [#allocation6], %s305
          %s307 = sand.u32 %s79, 1
          %s308 = smul.addr %s307, 16
          %s309 = scalar_lea.vmem [#allocation5], %s308
          %s310 = smul.u32 2, %s35
          %312 = vsyncadd %s306, 0
          %s313 = smul.addr %s34, 2
          %s314 = sadd.s32 %s310, %s313
          %s315 = smul.addr %s314, 8
          %s316 = scalar_lea.hbm %s1, %s315
          %s317 = sshll.u32 %s316, 4
          %s318 = int_to_ptr.hbm [resolvable:$true] %s317
          %s319 = sshll.u32 %s309, 4
          %s320 = int_to_ptr.vmem [resolvable:$true] %s319
          %325 = dma.hbm_to_vmem [thread:$0]  %s318, 256, %s320, %s306, 128, 128, 8
        $region24: #{tpu_custom_call.1} parent=15 // pred_fallthru
          _
        // Predicated region
        $region25: #{tpu_custom_call.1} parent=15 // pred_check
          %p326 = pneg %p117
        $region26: #{tpu_custom_call.1} parent=15 // pred_check_branch
          %328 = sbr.rel (%p326) target = $region28
        $region27: #{tpu_custom_call.1} parent=15 // pred_region
          %s329 = sand.u32 %s27, 1
          %s330 = scalar_lea.sflag [#allocation6], %s329
          %s331 = sand.u32 %s107, 1
          %s332 = smul.addr %s331, 16
          %s333 = scalar_lea.vmem [#allocation7], %s332
          %s334 = smul.u32 2, %s35
          %336 = vsyncadd %s330, 0
          %s337 = smul.addr %s34, 2
          %s338 = sadd.s32 %s334, %s337
          %s339 = smul.addr %s338, 8
          %s340 = scalar_lea.hbm %s2, %s339
          %s341 = sshll.u32 %s340, 4
          %s342 = int_to_ptr.hbm [resolvable:$true] %s341
          %s343 = sshll.u32 %s333, 4
          %s344 = int_to_ptr.vmem [resolvable:$true] %s343
          %349 = dma.hbm_to_vmem [thread:$0]  %s342, 256, %s344, %s330, 128, 128, 8
        $region28: #{tpu_custom_call.1} parent=15 // pred_fallthru
          _
        // Predicated region
        $region29: #{tpu_custom_call.1} parent=15 // pred_check
          %p350 = pneg %p153
        $region30: #{tpu_custom_call.1} parent=15 // pred_check_branch
          %352 = sbr.rel (%p350) target = $region32
        $region31: #{tpu_custom_call.1} parent=15 // pred_region
          %s353 = sand.u32 %s27, 1
          %s354 = scalar_lea.sflag [#allocation9], %s353
          %s355 = sand.u32 %s143, 1
          %s356 = smul.addr %s355, 8
          %s357 = scalar_lea.vmem [#allocation8], %s356
          %s358 = sadd.s32 %s35, 1
          %p359 = scmp.lt.s32.totalorder %s358, 0
          %s360 = scalar_select %p359, %s358, 0
          %s361 = smul.u32 %s360, 2
          %363 = vsyncadd %s354, 0
          %s364 = smul.addr %s34, 2
          %s365 = sadd.s32 %s361, %s364
          %s366 = smul.addr %s365, 8
          %s367 = scalar_lea.hbm %s3, %s366
          %s369 = sshll.u32 %s367, 4
          %s370 = int_to_ptr.hbm [resolvable:$true] %s369
          %s371 = sshll.u32 %s357, 4
          %s372 = int_to_ptr.vmem [resolvable:$true] %s371
          %374 = dma.hbm_to_vmem [thread:$0]  %s370, 128, %s372, %s354
        $region32: #{tpu_custom_call.1} parent=15 // pred_fallthru
          _
        // Predicated region
        $region33: #{tpu_custom_call.1} parent=15 // pred_check
          %p375 = pneg %p189
        $region34: #{tpu_custom_call.1} parent=15 // pred_check_branch
          %377 = sbr.rel (%p375) target = $region36
        $region35: #{tpu_custom_call.1} parent=15 // pred_region
          %s378 = sand.u32 %s27, 1
          %s379 = scalar_lea.sflag [#allocation9], %s378
          %s380 = sand.u32 %s179, 1
          %s381 = smul.addr %s380, 8
          %s382 = scalar_lea.vmem [#allocation10], %s381
          %s383 = sadd.s32 %s35, 1
          %p384 = scmp.lt.s32.totalorder %s383, 0
          %s385 = scalar_select %p384, %s383, 0
          %s386 = smul.u32 %s385, 2
          %388 = vsyncadd %s379, 0
          %s389 = smul.addr %s34, 2
          %s390 = sadd.s32 %s386, %s389
          %s391 = smul.addr %s390, 8
          %s392 = scalar_lea.hbm %s4, %s391
          %s394 = sshll.u32 %s392, 4
          %s395 = int_to_ptr.hbm [resolvable:$true] %s394
          %s396 = sshll.u32 %s382, 4
          %s397 = int_to_ptr.vmem [resolvable:$true] %s396
          %399 = dma.hbm_to_vmem [thread:$0]  %s395, 128, %s397, %s379
        $region36: #{tpu_custom_call.1} parent=15 // pred_fallthru
          _
        // Predicated region
        $region37: #{tpu_custom_call.1} parent=15 // pred_check
          %p400 = pneg %p225
        $region38: #{tpu_custom_call.1} parent=15 // pred_check_branch
          %402 = sbr.rel (%p400) target = $region40
        $region39: #{tpu_custom_call.1} parent=15 // pred_region
          %s403 = sand.u32 %s215, 1
          %s404 = scalar_lea.sflag [#allocation12], %s403
          %s405 = sand.u32 %s215, 1
          %s406 = smul.addr %s405, 8
          %s407 = scalar_lea.vmem [#allocation11], %s406
          %s408 = sadd.s32 %s35, 1
          %p409 = scmp.lt.s32.totalorder %s408, 0
          %s410 = scalar_select %p409, %s408, 0
          %s411 = smul.u32 %s410, 2
          %413 = vsyncadd %s404, 0
          %s414 = smul.addr %s34, 2
          %s415 = sadd.s32 %s411, %s414
          %s416 = smul.addr %s415, 8
          %s417 = scalar_lea.hbm %s5, %s416
          %s419 = sshll.u32 %s417, 4
          %s420 = int_to_ptr.hbm [resolvable:$true] %s419
          %s421 = sshll.u32 %s407, 4
          %s422 = int_to_ptr.vmem [resolvable:$true] %s421
          %424 = dma.hbm_to_vmem [thread:$0]  %s420, 128, %s422, %s404
        $region40: #{tpu_custom_call.1} parent=15 // pred_fallthru
          _
      $region16: #{tpu_custom_call.1} parent=5 // pred_fallthru
        _
      %p425 = scmp.le.s32.totalorder 1, %s27
      %p426 = scmp.lt.s32.totalorder %s27, 3
      %p427 = pnand %p425, %p426
      %p428 = pneg %p427
      // Predicated region
      $region41: #{tpu_custom_call.1} parent=5 // pred_check
        _
      $region42: #{tpu_custom_call.1} parent=5 // pred_check_branch
        %430 = sbr.rel (%p427) target = $region44
      $region43: #{tpu_custom_call.1} parent=5 // pred_region
        %s431 = ssub.s32 %s27, 1
        %s432 = sand.u32 %s54, 1
        %s433 = scalar_lea.sflag [#allocation3], %s432
        %s434 = sand.u32 %s54, 1
        %s435 = smul.addr %s434, 16
        %s436 = scalar_lea.vmem [#allocation2], %s435
        // Predicated region
        $region45: #{tpu_custom_call.1} parent=43 // pred_check
          %p437 = pneg %p67
        $region46: #{tpu_custom_call.1} parent=43 // pred_check_branch
          %439 = sbr.rel (%p437) target = $region48
        $region47: #{tpu_custom_call.1} parent=43 // pred_region
          %441 = dma.done %s433, 256
        $region48: #{tpu_custom_call.1} parent=43 // pred_fallthru
          _
        %s442 = sand.u32 %s32, 1
        %s443 = scalar_lea.sflag [#allocation6], %s442
        %s444 = sand.u32 %s82, 1
        %s445 = smul.addr %s444, 16
        %s446 = scalar_lea.vmem [#allocation5], %s445
        // Predicated region
        $region49: #{tpu_custom_call.1} parent=43 // pred_check
          %p447 = pneg %p95
        $region50: #{tpu_custom_call.1} parent=43 // pred_check_branch
          %449 = sbr.rel (%p447) target = $region52
        $region51: #{tpu_custom_call.1} parent=43 // pred_region
          %451 = dma.done %s443, 256
        $region52: #{tpu_custom_call.1} parent=43 // pred_fallthru
          _
        %s452 = sand.u32 %s32, 1
        %s453 = scalar_lea.sflag [#allocation6], %s452
        %s454 = sand.u32 %s110, 1
        %s455 = smul.addr %s454, 16
        %s456 = scalar_lea.vmem [#allocation7], %s455
        // Predicated region
        $region53: #{tpu_custom_call.1} parent=43 // pred_check
          %p457 = pneg %p123
        $region54: #{tpu_custom_call.1} parent=43 // pred_check_branch
          %459 = sbr.rel (%p457) target = $region56
        $region55: #{tpu_custom_call.1} parent=43 // pred_region
          %461 = dma.done %s453, 256
        $region56: #{tpu_custom_call.1} parent=43 // pred_fallthru
          _
        %s462 = sand.u32 %s32, 1
        %s463 = scalar_lea.sflag [#allocation9], %s462
        %s464 = sand.u32 %s146, 1
        %s465 = smul.addr %s464, 8
        %s466 = scalar_lea.vmem [#allocation8], %s465
        // Predicated region
        $region57: #{tpu_custom_call.1} parent=43 // pred_check
          %p467 = pneg %p159
        $region58: #{tpu_custom_call.1} parent=43 // pred_check_branch
          %469 = sbr.rel (%p467) target = $region60
        $region59: #{tpu_custom_call.1} parent=43 // pred_region
          %471 = dma.done %s463, 128
        $region60: #{tpu_custom_call.1} parent=43 // pred_fallthru
          _
        %s472 = sand.u32 %s32, 1
        %s473 = scalar_lea.sflag [#allocation9], %s472
        %s474 = sand.u32 %s182, 1
        %s475 = smul.addr %s474, 8
        %s476 = scalar_lea.vmem [#allocation10], %s475
        // Predicated region
        $region61: #{tpu_custom_call.1} parent=43 // pred_check
          %p477 = pneg %p195
        $region62: #{tpu_custom_call.1} parent=43 // pred_check_branch
          %479 = sbr.rel (%p477) target = $region64
        $region63: #{tpu_custom_call.1} parent=43 // pred_region
          %481 = dma.done %s473, 128
        $region64: #{tpu_custom_call.1} parent=43 // pred_fallthru
          _
        %s482 = sand.u32 %s218, 1
        %s483 = scalar_lea.sflag [#allocation12], %s482
        %s484 = sand.u32 %s218, 1
        %s485 = smul.addr %s484, 8
        %s486 = scalar_lea.vmem [#allocation11], %s485
        // Predicated region
        $region65: #{tpu_custom_call.1} parent=43 // pred_check
          %p487 = pneg %p231
        $region66: #{tpu_custom_call.1} parent=43 // pred_check_branch
          %489 = sbr.rel (%p487) target = $region68
        $region67: #{tpu_custom_call.1} parent=43 // pred_region
          %491 = dma.done %s483, 128
        $region68: #{tpu_custom_call.1} parent=43 // pred_fallthru
          _
        %s492 = sand.u32 %s54, 1
        %s493 = scalar_lea.sflag [#allocation3], %s492
        %s494 = sand.u32 %s54, 1
        %s495 = smul.addr %s494, 16
        %s496 = scalar_lea.vmem [#allocation2], %s495
        %p497 = pneg %p67
        %p498 = pneg %p64
        %s499 = sand.u32 %s32, 1
        %s500 = scalar_lea.sflag [#allocation6], %s499
        %s501 = sand.u32 %s82, 1
        %s502 = smul.addr %s501, 16
        %s503 = scalar_lea.vmem [#allocation5], %s502
        %p504 = pneg %p95
        %p505 = pneg %p92
        %s506 = sand.u32 %s32, 1
        %s507 = scalar_lea.sflag [#allocation6], %s506
        %s508 = sand.u32 %s110, 1
        %s509 = smul.addr %s508, 16
        %s510 = scalar_lea.vmem [#allocation7], %s509
        %p511 = pneg %p123
        %p512 = pneg %p120
        %s513 = sand.u32 %s32, 1
        %s514 = scalar_lea.sflag [#allocation9], %s513
        %s515 = sand.u32 %s146, 1
        %s516 = smul.addr %s515, 8
        %s517 = scalar_lea.vmem [#allocation8], %s516
        %p518 = pneg %p159
        %p519 = pneg %p156
        %s520 = sand.u32 %s32, 1
        %s521 = scalar_lea.sflag [#allocation9], %s520
        %s522 = sand.u32 %s182, 1
        %s523 = smul.addr %s522, 8
        %s524 = scalar_lea.vmem [#allocation10], %s523
        %p525 = pneg %p195
        %p526 = pneg %p192
        %s527 = sand.u32 %s218, 1
        %s528 = scalar_lea.sflag [#allocation12], %s527
        %s529 = sand.u32 %s218, 1
        %s530 = smul.addr %s529, 8
        %s531 = scalar_lea.vmem [#allocation11], %s530
        %p532 = pneg %p231
        %p533 = pneg %p228
        %p534 = pneg %p259
        %p535 = pneg %p256
        %s536 = sand.u32 %s246, 1
        %s537 = scalar_lea.sflag [#allocation4], %s536
        %s538 = sand.u32 %s246, 1
        %s539 = scalar_lea.vmem [#allocation13], %s538
        %s540 = smul.u32 2, %s37
        %s541 = smul.u32 2, %s37
        %s542 = smul.u32 2, %s37
        %s543 = sadd.s32 %s37, 1
        %p544 = scmp.lt.s32.totalorder %s543, 0
        %s545 = scalar_select %p544, %s543, 0
        %s546 = smul.u32 %s545, 2
        %s547 = sadd.s32 %s37, 1
        %p548 = scmp.lt.s32.totalorder %s547, 0
        %s549 = scalar_select %p548, %s547, 0
        %s550 = smul.u32 %s549, 2
        %s551 = sadd.s32 %s37, 1
        %p552 = scmp.lt.s32.totalorder %s551, 0
        %s553 = scalar_select %p552, %s551, 0
        %s554 = smul.u32 %s553, 2
        %v555 = vld [vmem:[%s436] sm:$0xff]
        %v556 = vld [vmem:[%s436 + $0x8] sm:$0xff]
        %v557 = vld [vmem:[%s446] sm:$0xff]
        %v558 = vld [vmem:[%s446 + $0x8] sm:$0xff]
        %v559 = vld [vmem:[%s456] sm:$0xff]
        %v560 = vld [vmem:[%s456 + $0x8] sm:$0xff]
        %v561 = vld [vmem:[%s466] sm:$0xff]
        %v562 = vld [vmem:[%s476] sm:$0xff]
        %v563 = vld [vmem:[%s486] sm:$0xff]
        %v564 = vsub.f32 %v555, %v557
        %v565 = vsub.f32 %v556, %v558
        %v566 = vmul.f32 %v564, %v559
        %v567 = vmul.f32 %v565, %v560
        %v568 = vsub.f32 %v561, %v562
        %v569 = vmul.f32 %v568, %v563
        %v570 = vlaneseq
        %v571 = vshrl.u32 %v570, 7
        %v572 = vadd.s32 %v571, 8
        %v573 = vadd.s32 %v571, 16
        %s574 = smul.u32 %s37, 16
        %v575 = vstv %s574
        %v576 = vadd.s32 %v571, %v575
        %v577 = vadd.s32 %v572, %v575
        %v578 = vadd.s32 %v573, %v575
        %v579 = vlaneseq
        %v580 = vand.u32 %v579, 127
        %vm581 = vcmp.lt.s32.totalorder %v571, 16
        %vm582 = vcmp.lt.s32.totalorder %v572, 16
        %vm583 = vcmp.lt.s32.totalorder %v573, 16
        %vm584 = vcmask 1047680
        %585 = vrot.lane.b32.xlu0 %v566, 16
        %v586 = vpop.permute.xlu0 %585
        %v587 = vsel %vm584, %v586, %v566
        %588 = vrot.lane.b32.xlu0 %v567, 16
        %v589 = vpop.permute.xlu0 %588
        %v590 = vsel %vm584, %v589, %v567
        %591 = vrot.lane.b32.xlu0 %v569, 16
        %v592 = vpop.permute.xlu0 %591
        %v593 = vsel %vm584, %v592, %v569
        %594 = vrot.lane.b32.xlu0 %v587, 16
        %v595 = vpop.permute.xlu0 %594
        %596 = vrot.lane.b32.xlu0 %v590, 16
        %v597 = vpop.permute.xlu0 %596
        %598 = vrot.lane.b32.xlu0 %v593, 16
        %v599 = vpop.permute.xlu0 %598
        %v600 = vsel %vm584, %v595, %v566
        %v601 = vsel %vm584, %v597, %v567
        %v602 = vsel %vm584, %v599, %v569
        %603 = vrot.lane.b32.xlu0 %v559, 16
        %v604 = vpop.permute.xlu0 %603
        %v605 = vsel %vm584, %v604, %v559
        %606 = vrot.lane.b32.xlu0 %v560, 16
        %v607 = vpop.permute.xlu0 %606
        %v608 = vsel %vm584, %v607, %v560
        %609 = vrot.lane.b32.xlu0 %v563, 16
        %v610 = vpop.permute.xlu0 %609
        %v611 = vsel %vm584, %v610, %v563
        %612 = vrot.lane.b32.xlu0 %v605, 16
        %v613 = vpop.permute.xlu0 %612
        %614 = vrot.lane.b32.xlu0 %v608, 16
        %v615 = vpop.permute.xlu0 %614
        %616 = vrot.lane.b32.xlu0 %v611, 16
        %v617 = vpop.permute.xlu0 %616
        %v618 = vsel %vm584, %v613, %v559
        %v619 = vsel %vm584, %v615, %v560
        %v620 = vsel %vm584, %v617, %v563
        %624 = vrot.lane.b32.xlu0 %v566, 1
        %v625 = vpop.permute.xlu0 %624
        %626 = vrot.lane.b32.xlu0 %v567, 1
        %v627 = vpop.permute.xlu0 %626
        %628 = vrot.lane.b32.xlu0 %v569, 1
        %v629 = vpop.permute.xlu0 %628
        %v633 = vsub.f32 %v600, %v625
        %v634 = vsub.f32 %v601, %v627
        %v635 = vsub.f32 %v602, %v629
        %v636 = vand.u32 2147483647, %v633
        %v637 = vand.u32 2147483647, %v634
        %v638 = vand.u32 2147483647, %v635
        %vm639 = vcmp.lt.f32.partialorder %v636, 1.0
        %vm640 = vcmp.lt.f32.partialorder %v637, 1.0
        %vm641 = vcmp.lt.f32.partialorder %v638, 1.0
        %v642 = vmul.f32 %v633, 0.5
        %v643 = vmul.f32 %v634, 0.5
        %v644 = vmul.f32 %v635, 0.5
        %v645 = vmul.f32 %v642, %v633
        %v646 = vmul.f32 %v643, %v634
        %v647 = vmul.f32 %v644, %v635
        %v648 = vsub.f32 %v636, 0.5
        %v649 = vsub.f32 %v637, 0.5
        %v650 = vsub.f32 %v638, 0.5
        %v651 = vsel %vm639, %v645, %v648
        %v652 = vsel %vm640, %v646, %v649
        %v653 = vsel %vm641, %v647, %v650
        %657 = vrot.lane.b32.xlu0 %v618, 127
        %v658 = vpop.permute.xlu0 %657
        %659 = vrot.lane.b32.xlu0 %v619, 127
        %v660 = vpop.permute.xlu0 %659
        %661 = vrot.lane.b32.xlu0 %v620, 127
        %v662 = vpop.permute.xlu0 %661
        %v666 = vmul.f32 %v559, %v658
        %v667 = vmul.f32 %v560, %v660
        %v668 = vmul.f32 %v563, %v662
        %672 = vrot.lane.b32.xlu0 %v666, 1
        %v673 = vpop.permute.xlu0 %672
        %674 = vrot.lane.b32.xlu0 %v667, 1
        %v675 = vpop.permute.xlu0 %674
        %676 = vrot.lane.b32.xlu0 %v668, 1
        %v677 = vpop.permute.xlu0 %676
        %v681 = vmul.f32 %v651, %v673
        %v682 = vmul.f32 %v652, %v675
        %v683 = vmul.f32 %v653, %v677
        %v684 = vadd.s32 %v580, 1
        %vm685 = vcmp.lt.s32.totalorder %v684, 16
        %v686 = vsel %vm685, 1, 0
        %vm687 = vcmp.eq.s32.totalorder %v686, 1
        %691 = vrot.lane.b32.xlu0 %v681, 127
        %v692 = vpop.permute.xlu0 %691
        %693 = vrot.lane.b32.xlu0 %v682, 127
        %v694 = vpop.permute.xlu0 %693
        %695 = vrot.lane.b32.xlu0 %v683, 127
        %v696 = vpop.permute.xlu0 %695
        %v700 = vsel %vm687, %v692, 0.0
        %v701 = vsel %vm687, %v694, 0.0
        %v702 = vsel %vm687, %v696, 0.0
        %v703 = vsel %vm581, 1, 0
        %v704 = vsel %vm582, 1, 0
        %v705 = vsel %vm583, 1, 0
        %vm706 = vcmp.eq.s32.totalorder %v703, 1
        %vm707 = vcmp.eq.s32.totalorder %v704, 1
        %vm708 = vcmp.eq.s32.totalorder %v705, 1
        %v709 = vsel %vm706, %v700, 0.0
        %v710 = vsel %vm707, %v701, 0.0
        %v711 = vsel %vm708, %v702, 0.0
        %vm712 = vcmask 130048
        %v713 = vsel %vm712, %v709, 0.0
        %v714 = vsel %vm712, %v710, 0.0
        %v715 = vadd.f32 %v713, %v714
        %v716 = vsel %vm712, %v711, 0.0
        %v717 = vadd.f32 %v715, %v716
        %718 = vadd.xlane.f32.xlu0 %v717
        %v719 = vpop.xlane.xlu0 %718
        %v720 = vrot.slane %v719, 4
        %v721 = vadd.f32 %v719, %v720
        %v722 = vrot.slane %v721, 2
        %v723 = vadd.f32 %v721, %v722
        %v724 = vrot.slane %v723, 1
        %v725 = vadd.f32 %v723, %v724
        %s726 = vtos %v725
        %s727 = sadd.f32 %s726, 0.0
        %v728 = vrot.slane %v566, 1
        %v729 = vrot.slane %v567, 1
        %v730 = vrot.slane %v569, 1
        %vm731 = vcmp.lt.s32.totalorder %v571, 7
        %v732 = vsel %vm731, %v729, %v730
        %v733 = vsel %vm731, %v728, %v729
        %v734 = vsel %vm731, %v730, %v728
        %v735 = vrot.slane %v559, 1
        %v736 = vrot.slane %v560, 1
        %v737 = vrot.slane %v563, 1
        %v738 = vsel %vm731, %v736, %v737
        %v739 = vsel %vm731, %v735, %v736
        %v740 = vsel %vm731, %v737, %v735
        %v741 = vsub.f32 %v733, %v566
        %v742 = vsub.f32 %v732, %v567
        %v743 = vsub.f32 %v734, %v569
        %v744 = vand.u32 2147483647, %v741
        %v745 = vand.u32 2147483647, %v742
        %v746 = vand.u32 2147483647, %v743
        %vm747 = vcmp.lt.f32.partialorder %v744, 1.0
        %vm748 = vcmp.lt.f32.partialorder %v745, 1.0
        %vm749 = vcmp.lt.f32.partialorder %v746, 1.0
        %v750 = vmul.f32 %v741, 0.5
        %v751 = vmul.f32 %v742, 0.5
        %v752 = vmul.f32 %v743, 0.5
        %v753 = vmul.f32 %v750, %v741
        %v754 = vmul.f32 %v751, %v742
        %v755 = vmul.f32 %v752, %v743
        %v756 = vsub.f32 %v744, 0.5
        %v757 = vsub.f32 %v745, 0.5
        %v758 = vsub.f32 %v746, 0.5
        %v759 = vsel %vm747, %v753, %v756
        %v760 = vsel %vm748, %v754, %v757
        %v761 = vsel %vm749, %v755, %v758
        %v762 = vmul.f32 %v559, %v739
        %v763 = vmul.f32 %v560, %v738
        %v764 = vmul.f32 %v563, %v740
        %v765 = vmul.f32 %v759, %v762
        %v766 = vmul.f32 %v760, %v763
        %v767 = vmul.f32 %v761, %v764
        %v768 = vadd.s32 %v576, 1
        %v769 = vadd.s32 %v577, 1
        %v770 = vadd.s32 %v578, 1
        %vm771 = vcmp.lt.s32.totalorder %v768, 16
        %vm772 = vcmp.lt.s32.totalorder %v769, 16
        %vm773 = vcmp.lt.s32.totalorder %v770, 16
        %vm774 = vmand %vm581, %vm771
        %vm775 = vmand %vm582, %vm772
        %vm776 = vmand %vm583, %vm773
        %v777 = vsel %vm774, 1, 0
        %v778 = vsel %vm775, 1, 0
        %v779 = vsel %vm776, 1, 0
        %vm780 = vcmp.eq.s32.totalorder %v777, 1
        %vm781 = vcmp.eq.s32.totalorder %v778, 1
        %vm782 = vcmp.eq.s32.totalorder %v779, 1
        %v783 = vsel %vm780, %v765, 0.0
        %v784 = vsel %vm781, %v766, 0.0
        %v785 = vsel %vm782, %v767, 0.0
        %v786 = vsel %vm712, %v783, 0.0
        %v787 = vsel %vm712, %v784, 0.0
        %v788 = vadd.f32 %v786, %v787
        %v789 = vsel %vm712, %v785, 0.0
        %v790 = vadd.f32 %v788, %v789
        %791 = vadd.xlane.f32.xlu0 %v790
        %v792 = vpop.xlane.xlu0 %791
        %v793 = vrot.slane %v792, 4
        %v794 = vadd.f32 %v792, %v793
        %v795 = vrot.slane %v794, 2
        %v796 = vadd.f32 %v794, %v795
        %v797 = vrot.slane %v796, 1
        %v798 = vadd.f32 %v796, %v797
        %s799 = vtos %v798
        %s800 = sadd.f32 %s727, %s799
        %v801 = vsel %vm706, %v559, 0.0
        %v802 = vsel %vm707, %v560, 0.0
        %v803 = vsel %vm708, %v563, 0.0
        %v804 = vsel %vm712, %v801, 0.0
        %v805 = vsel %vm712, %v802, 0.0
        %v806 = vadd.f32 %v804, %v805
        %v807 = vsel %vm712, %v803, 0.0
        %v808 = vadd.f32 %v806, %v807
        %809 = vadd.xlane.f32.xlu0 %v808
        %v810 = vpop.xlane.xlu0 %809
        %v811 = vrot.slane %v810, 4
        %v812 = vadd.f32 %v810, %v811
        %v813 = vrot.slane %v812, 2
        %v814 = vadd.f32 %v812, %v813
        %v815 = vrot.slane %v814, 1
        %v816 = vadd.f32 %v814, %v815
        %s817 = vtos %v816
        %vm818 = vcmp.eq.s32.totalorder %v580, 0
        %v819 = vstv %s800
        %v820 = vsel %vm818, %v819, 0.0
        %vm821 = vcmp.eq.s32.totalorder %v580, 4
        %v822 = vstv %s817
        %v823 = vsel %vm821, %v822, %v820
        %v824 = vand.u32 %v576, 1
        %v825 = vand.u32 %v577, 1
        %v826 = vand.u32 %v578, 1
        %vm827 = vcmp.eq.s32.totalorder %v824, 0
        %vm828 = vcmp.eq.s32.totalorder %v825, 0
        %vm829 = vcmp.eq.s32.totalorder %v826, 0
        %vm830 = vmand %vm581, %vm827
        %vm831 = vmand %vm582, %vm828
        %vm832 = vmand %vm583, %vm829
        %v833 = vand.u32 %v580, 1
        %vm834 = vcmp.eq.s32.totalorder %v833, 0
        %835 = vrot.lane.b32.xlu0 %v566, 2
        %v836 = vpop.permute.xlu0 %835
        %837 = vrot.lane.b32.xlu0 %v567, 2
        %v838 = vpop.permute.xlu0 %837
        %839 = vrot.lane.b32.xlu0 %v569, 2
        %v840 = vpop.permute.xlu0 %839
        %v844 = vsub.f32 %v600, %v836
        %v845 = vsub.f32 %v601, %v838
        %v846 = vsub.f32 %v602, %v840
        %v847 = vand.u32 2147483647, %v844
        %v848 = vand.u32 2147483647, %v845
        %v849 = vand.u32 2147483647, %v846
        %vm850 = vcmp.lt.f32.partialorder %v847, 1.0
        %vm851 = vcmp.lt.f32.partialorder %v848, 1.0
        %vm852 = vcmp.lt.f32.partialorder %v849, 1.0
        %v853 = vmul.f32 %v844, 0.5
        %v854 = vmul.f32 %v845, 0.5
        %v855 = vmul.f32 %v846, 0.5
        %v856 = vmul.f32 %v853, %v844
        %v857 = vmul.f32 %v854, %v845
        %v858 = vmul.f32 %v855, %v846
        %v859 = vsub.f32 %v847, 0.5
        %v860 = vsub.f32 %v848, 0.5
        %v861 = vsub.f32 %v849, 0.5
        %v862 = vsel %vm850, %v856, %v859
        %v863 = vsel %vm851, %v857, %v860
        %v864 = vsel %vm852, %v858, %v861
        %865 = vrot.lane.b32.xlu0 %v618, 126
        %v866 = vpop.permute.xlu0 %865
        %867 = vrot.lane.b32.xlu0 %v619, 126
        %v868 = vpop.permute.xlu0 %867
        %869 = vrot.lane.b32.xlu0 %v620, 126
        %v870 = vpop.permute.xlu0 %869
        %v874 = vmul.f32 %v559, %v866
        %v875 = vmul.f32 %v560, %v868
        %v876 = vmul.f32 %v563, %v870
        %880 = vrot.lane.b32.xlu0 %v874, 2
        %v881 = vpop.permute.xlu0 %880
        %882 = vrot.lane.b32.xlu0 %v875, 2
        %v883 = vpop.permute.xlu0 %882
        %884 = vrot.lane.b32.xlu0 %v876, 2
        %v885 = vpop.permute.xlu0 %884
        %v889 = vmul.f32 %v862, %v881
        %v890 = vmul.f32 %v863, %v883
        %v891 = vmul.f32 %v864, %v885
        %v892 = vadd.s32 %v580, 2
        %vm893 = vcmp.lt.s32.totalorder %v892, 16
        %vm894 = vmand %vm893, %vm834
        %v895 = vsel %vm894, 1, 0
        %vm896 = vcmp.eq.s32.totalorder %v895, 1
        %900 = vrot.lane.b32.xlu0 %v889, 126
        %v901 = vpop.permute.xlu0 %900
        %902 = vrot.lane.b32.xlu0 %v890, 126
        %v903 = vpop.permute.xlu0 %902
        %904 = vrot.lane.b32.xlu0 %v891, 126
        %v905 = vpop.permute.xlu0 %904
        %v909 = vsel %vm896, %v901, 0.0
        %v910 = vsel %vm896, %v903, 0.0
        %v911 = vsel %vm896, %v905, 0.0
        %v912 = vsel %vm830, 1, 0
        %v913 = vsel %vm831, 1, 0
        %v914 = vsel %vm832, 1, 0
        %vm915 = vcmp.eq.s32.totalorder %v912, 1
        %vm916 = vcmp.eq.s32.totalorder %v913, 1
        %vm917 = vcmp.eq.s32.totalorder %v914, 1
        %v918 = vsel %vm915, %v909, 0.0
        %v919 = vsel %vm916, %v910, 0.0
        %v920 = vsel %vm917, %v911, 0.0
        %v921 = vsel %vm712, %v918, 0.0
        %v922 = vsel %vm712, %v919, 0.0
        %v923 = vadd.f32 %v921, %v922
        %v924 = vsel %vm712, %v920, 0.0
        %v925 = vadd.f32 %v923, %v924
        %926 = vadd.xlane.f32.xlu0 %v925
        %v927 = vpop.xlane.xlu0 %926
        %v928 = vrot.slane %v927, 4
        %v929 = vadd.f32 %v927, %v928
        %v930 = vrot.slane %v929, 2
        %v931 = vadd.f32 %v929, %v930
        %v932 = vrot.slane %v931, 1
        %v933 = vadd.f32 %v931, %v932
        %s934 = vtos %v933
        %s935 = sadd.f32 %s934, 0.0
        %v936 = vrot.slane %v566, 2
        %v937 = vrot.slane %v567, 2
        %v938 = vrot.slane %v569, 2
        %vm939 = vcmp.lt.s32.totalorder %v571, 6
        %v940 = vsel %vm939, %v937, %v938
        %v941 = vsel %vm939, %v936, %v937
        %v942 = vsel %vm939, %v938, %v936
        %v943 = vrot.slane %v559, 2
        %v944 = vrot.slane %v560, 2
        %v945 = vrot.slane %v563, 2
        %v946 = vsel %vm939, %v944, %v945
        %v947 = vsel %vm939, %v943, %v944
        %v948 = vsel %vm939, %v945, %v943
        %v949 = vsub.f32 %v941, %v566
        %v950 = vsub.f32 %v940, %v567
        %v951 = vsub.f32 %v942, %v569
        %v952 = vand.u32 2147483647, %v949
        %v953 = vand.u32 2147483647, %v950
        %v954 = vand.u32 2147483647, %v951
        %vm955 = vcmp.lt.f32.partialorder %v952, 1.0
        %vm956 = vcmp.lt.f32.partialorder %v953, 1.0
        %vm957 = vcmp.lt.f32.partialorder %v954, 1.0
        %v958 = vmul.f32 %v949, 0.5
        %v959 = vmul.f32 %v950, 0.5
        %v960 = vmul.f32 %v951, 0.5
        %v961 = vmul.f32 %v958, %v949
        %v962 = vmul.f32 %v959, %v950
        %v963 = vmul.f32 %v960, %v951
        %v964 = vsub.f32 %v952, 0.5
        %v965 = vsub.f32 %v953, 0.5
        %v966 = vsub.f32 %v954, 0.5
        %v967 = vsel %vm955, %v961, %v964
        %v968 = vsel %vm956, %v962, %v965
        %v969 = vsel %vm957, %v963, %v966
        %v970 = vmul.f32 %v559, %v947
        %v971 = vmul.f32 %v560, %v946
        %v972 = vmul.f32 %v563, %v948
        %v973 = vmul.f32 %v967, %v970
        %v974 = vmul.f32 %v968, %v971
        %v975 = vmul.f32 %v969, %v972
        %v976 = vadd.s32 %v576, 2
        %v977 = vadd.s32 %v577, 2
        %v978 = vadd.s32 %v578, 2
        %vm979 = vcmp.lt.s32.totalorder %v976, 16
        %vm980 = vcmp.lt.s32.totalorder %v977, 16
        %vm981 = vcmp.lt.s32.totalorder %v978, 16
        %vm982 = vmand %vm830, %vm979
        %vm983 = vmand %vm831, %vm980
        %vm984 = vmand %vm832, %vm981
        %v985 = vsel %vm982, 1, 0
        %v986 = vsel %vm983, 1, 0
        %v987 = vsel %vm984, 1, 0
        %vm988 = vcmp.eq.s32.totalorder %v985, 1
        %vm989 = vcmp.eq.s32.totalorder %v986, 1
        %vm990 = vcmp.eq.s32.totalorder %v987, 1
        %v991 = vsel %vm988, %v973, 0.0
        %v992 = vsel %vm989, %v974, 0.0
        %v993 = vsel %vm990, %v975, 0.0
        %v994 = vsel %vm834, 1, 0
        %vm995 = vcmp.eq.s32.totalorder %v994, 1
        %v996 = vsel %vm995, %v991, 0.0
        %v997 = vsel %vm995, %v992, 0.0
        %v998 = vsel %vm995, %v993, 0.0
        %v999 = vsel %vm712, %v996, 0.0
        %v1000 = vsel %vm712, %v997, 0.0
        %v1001 = vadd.f32 %v999, %v1000
        %v1002 = vsel %vm712, %v998, 0.0
        %v1003 = vadd.f32 %v1001, %v1002
        %1004 = vadd.xlane.f32.xlu0 %v1003
        %v1005 = vpop.xlane.xlu0 %1004
        %v1006 = vrot.slane %v1005, 4
        %v1007 = vadd.f32 %v1005, %v1006
        %v1008 = vrot.slane %v1007, 2
        %v1009 = vadd.f32 %v1007, %v1008
        %v1010 = vrot.slane %v1009, 1
        %v1011 = vadd.f32 %v1009, %v1010
        %s1012 = vtos %v1011
        %s1013 = sadd.f32 %s935, %s1012
        %v1014 = vsel %vm915, %v559, 0.0
        %v1015 = vsel %vm916, %v560, 0.0
        %v1016 = vsel %vm917, %v563, 0.0
        %v1017 = vsel %vm995, %v1014, 0.0
        %v1018 = vsel %vm995, %v1015, 0.0
        %v1019 = vsel %vm995, %v1016, 0.0
        %v1020 = vsel %vm712, %v1017, 0.0
        %v1021 = vsel %vm712, %v1018, 0.0
        %v1022 = vadd.f32 %v1020, %v1021
        %v1023 = vsel %vm712, %v1019, 0.0
        %v1024 = vadd.f32 %v1022, %v1023
        %1025 = vadd.xlane.f32.xlu0 %v1024
        %v1026 = vpop.xlane.xlu0 %1025
        %v1027 = vrot.slane %v1026, 4
        %v1028 = vadd.f32 %v1026, %v1027
        %v1029 = vrot.slane %v1028, 2
        %v1030 = vadd.f32 %v1028, %v1029
        %v1031 = vrot.slane %v1030, 1
        %v1032 = vadd.f32 %v1030, %v1031
        %s1033 = vtos %v1032
        %vm1034 = vcmp.eq.s32.totalorder %v580, 1
        %v1035 = vstv %s1013
        %v1036 = vsel %vm1034, %v1035, %v823
        %vm1037 = vcmp.eq.s32.totalorder %v580, 5
        %v1038 = vstv %s1033
        %v1039 = vsel %vm1037, %v1038, %v1036
        %v1040 = vand.u32 %v576, 3
        %v1041 = vand.u32 %v577, 3
        %v1042 = vand.u32 %v578, 3
        %vm1043 = vcmp.eq.s32.totalorder %v1040, 0
        %vm1044 = vcmp.eq.s32.totalorder %v1041, 0
        %vm1045 = vcmp.eq.s32.totalorder %v1042, 0
        %vm1046 = vmand %vm581, %vm1043
        %vm1047 = vmand %vm582, %vm1044
        %vm1048 = vmand %vm583, %vm1045
        %v1049 = vand.u32 %v580, 3
        %vm1050 = vcmp.eq.s32.totalorder %v1049, 0
        %1051 = vrot.lane.b32.xlu0 %v566, 4
        %v1052 = vpop.permute.xlu0 %1051
        %1053 = vrot.lane.b32.xlu0 %v567, 4
        %v1054 = vpop.permute.xlu0 %1053
        %1055 = vrot.lane.b32.xlu0 %v569, 4
        %v1056 = vpop.permute.xlu0 %1055
        %v1060 = vsub.f32 %v600, %v1052
        %v1061 = vsub.f32 %v601, %v1054
        %v1062 = vsub.f32 %v602, %v1056
        %v1063 = vand.u32 2147483647, %v1060
        %v1064 = vand.u32 2147483647, %v1061
        %v1065 = vand.u32 2147483647, %v1062
        %vm1066 = vcmp.lt.f32.partialorder %v1063, 1.0
        %vm1067 = vcmp.lt.f32.partialorder %v1064, 1.0
        %vm1068 = vcmp.lt.f32.partialorder %v1065, 1.0
        %v1069 = vmul.f32 %v1060, 0.5
        %v1070 = vmul.f32 %v1061, 0.5
        %v1071 = vmul.f32 %v1062, 0.5
        %v1072 = vmul.f32 %v1069, %v1060
        %v1073 = vmul.f32 %v1070, %v1061
        %v1074 = vmul.f32 %v1071, %v1062
        %v1075 = vsub.f32 %v1063, 0.5
        %v1076 = vsub.f32 %v1064, 0.5
        %v1077 = vsub.f32 %v1065, 0.5
        %v1078 = vsel %vm1066, %v1072, %v1075
        %v1079 = vsel %vm1067, %v1073, %v1076
        %v1080 = vsel %vm1068, %v1074, %v1077
        %1081 = vrot.lane.b32.xlu0 %v618, 124
        %v1082 = vpop.permute.xlu0 %1081
        %1083 = vrot.lane.b32.xlu0 %v619, 124
        %v1084 = vpop.permute.xlu0 %1083
        %1085 = vrot.lane.b32.xlu0 %v620, 124
        %v1086 = vpop.permute.xlu0 %1085
        %v1090 = vmul.f32 %v559, %v1082
        %v1091 = vmul.f32 %v560, %v1084
        %v1092 = vmul.f32 %v563, %v1086
        %1096 = vrot.lane.b32.xlu0 %v1090, 4
        %v1097 = vpop.permute.xlu0 %1096
        %1098 = vrot.lane.b32.xlu0 %v1091, 4
        %v1099 = vpop.permute.xlu0 %1098
        %1100 = vrot.lane.b32.xlu0 %v1092, 4
        %v1101 = vpop.permute.xlu0 %1100
        %v1105 = vmul.f32 %v1078, %v1097
        %v1106 = vmul.f32 %v1079, %v1099
        %v1107 = vmul.f32 %v1080, %v1101
        %v1108 = vadd.s32 %v580, 4
        %vm1109 = vcmp.lt.s32.totalorder %v1108, 16
        %vm1110 = vmand %vm1109, %vm1050
        %v1111 = vsel %vm1110, 1, 0
        %vm1112 = vcmp.eq.s32.totalorder %v1111, 1
        %1116 = vrot.lane.b32.xlu0 %v1105, 124
        %v1117 = vpop.permute.xlu0 %1116
        %1118 = vrot.lane.b32.xlu0 %v1106, 124
        %v1119 = vpop.permute.xlu0 %1118
        %1120 = vrot.lane.b32.xlu0 %v1107, 124
        %v1121 = vpop.permute.xlu0 %1120
        %v1125 = vsel %vm1112, %v1117, 0.0
        %v1126 = vsel %vm1112, %v1119, 0.0
        %v1127 = vsel %vm1112, %v1121, 0.0
        %v1128 = vsel %vm1046, 1, 0
        %v1129 = vsel %vm1047, 1, 0
        %v1130 = vsel %vm1048, 1, 0
        %vm1131 = vcmp.eq.s32.totalorder %v1128, 1
        %vm1132 = vcmp.eq.s32.totalorder %v1129, 1
        %vm1133 = vcmp.eq.s32.totalorder %v1130, 1
        %v1134 = vsel %vm1131, %v1125, 0.0
        %v1135 = vsel %vm1132, %v1126, 0.0
        %v1136 = vsel %vm1133, %v1127, 0.0
        %v1137 = vsel %vm712, %v1134, 0.0
        %v1138 = vsel %vm712, %v1135, 0.0
        %v1139 = vadd.f32 %v1137, %v1138
        %v1140 = vsel %vm712, %v1136, 0.0
        %v1141 = vadd.f32 %v1139, %v1140
        %1142 = vadd.xlane.f32.xlu0 %v1141
        %v1143 = vpop.xlane.xlu0 %1142
        %v1144 = vrot.slane %v1143, 4
        %v1145 = vadd.f32 %v1143, %v1144
        %v1146 = vrot.slane %v1145, 2
        %v1147 = vadd.f32 %v1145, %v1146
        %v1148 = vrot.slane %v1147, 1
        %v1149 = vadd.f32 %v1147, %v1148
        %s1150 = vtos %v1149
        %s1151 = sadd.f32 %s1150, 0.0
        %v1152 = vrot.slane %v566, 4
        %v1153 = vrot.slane %v567, 4
        %v1154 = vrot.slane %v569, 4
        %vm1155 = vcmp.lt.s32.totalorder %v571, 4
        %v1156 = vsel %vm1155, %v1153, %v1154
        %v1157 = vsel %vm1155, %v1152, %v1153
        %v1158 = vsel %vm1155, %v1154, %v1152
        %v1159 = vrot.slane %v559, 4
        %v1160 = vrot.slane %v560, 4
        %v1161 = vrot.slane %v563, 4
        %v1162 = vsel %vm1155, %v1160, %v1161
        %v1163 = vsel %vm1155, %v1159, %v1160
        %v1164 = vsel %vm1155, %v1161, %v1159
        %v1165 = vsub.f32 %v1157, %v566
        %v1166 = vsub.f32 %v1156, %v567
        %v1167 = vsub.f32 %v1158, %v569
        %v1168 = vand.u32 2147483647, %v1165
        %v1169 = vand.u32 2147483647, %v1166
        %v1170 = vand.u32 2147483647, %v1167
        %vm1171 = vcmp.lt.f32.partialorder %v1168, 1.0
        %vm1172 = vcmp.lt.f32.partialorder %v1169, 1.0
        %vm1173 = vcmp.lt.f32.partialorder %v1170, 1.0
        %v1174 = vmul.f32 %v1165, 0.5
        %v1175 = vmul.f32 %v1166, 0.5
        %v1176 = vmul.f32 %v1167, 0.5
        %v1177 = vmul.f32 %v1174, %v1165
        %v1178 = vmul.f32 %v1175, %v1166
        %v1179 = vmul.f32 %v1176, %v1167
        %v1180 = vsub.f32 %v1168, 0.5
        %v1181 = vsub.f32 %v1169, 0.5
        %v1182 = vsub.f32 %v1170, 0.5
        %v1183 = vsel %vm1171, %v1177, %v1180
        %v1184 = vsel %vm1172, %v1178, %v1181
        %v1185 = vsel %vm1173, %v1179, %v1182
        %v1186 = vmul.f32 %v559, %v1163
        %v1187 = vmul.f32 %v560, %v1162
        %v1188 = vmul.f32 %v563, %v1164
        %v1189 = vmul.f32 %v1183, %v1186
        %v1190 = vmul.f32 %v1184, %v1187
        %v1191 = vmul.f32 %v1185, %v1188
        %v1192 = vadd.s32 %v576, 4
        %v1193 = vadd.s32 %v577, 4
        %v1194 = vadd.s32 %v578, 4
        %vm1195 = vcmp.lt.s32.totalorder %v1192, 16
        %vm1196 = vcmp.lt.s32.totalorder %v1193, 16
        %vm1197 = vcmp.lt.s32.totalorder %v1194, 16
        %vm1198 = vmand %vm1046, %vm1195
        %vm1199 = vmand %vm1047, %vm1196
        %vm1200 = vmand %vm1048, %vm1197
        %v1201 = vsel %vm1198, 1, 0
        %v1202 = vsel %vm1199, 1, 0
        %v1203 = vsel %vm1200, 1, 0
        %vm1204 = vcmp.eq.s32.totalorder %v1201, 1
        %vm1205 = vcmp.eq.s32.totalorder %v1202, 1
        %vm1206 = vcmp.eq.s32.totalorder %v1203, 1
        %v1207 = vsel %vm1204, %v1189, 0.0
        %v1208 = vsel %vm1205, %v1190, 0.0
        %v1209 = vsel %vm1206, %v1191, 0.0
        %v1210 = vsel %vm1050, 1, 0
        %vm1211 = vcmp.eq.s32.totalorder %v1210, 1
        %v1212 = vsel %vm1211, %v1207, 0.0
        %v1213 = vsel %vm1211, %v1208, 0.0
        %v1214 = vsel %vm1211, %v1209, 0.0
        %v1215 = vsel %vm712, %v1212, 0.0
        %v1216 = vsel %vm712, %v1213, 0.0
        %v1217 = vadd.f32 %v1215, %v1216
        %v1218 = vsel %vm712, %v1214, 0.0
        %v1219 = vadd.f32 %v1217, %v1218
        %1220 = vadd.xlane.f32.xlu0 %v1219
        %v1221 = vpop.xlane.xlu0 %1220
        %v1222 = vrot.slane %v1221, 4
        %v1223 = vadd.f32 %v1221, %v1222
        %v1224 = vrot.slane %v1223, 2
        %v1225 = vadd.f32 %v1223, %v1224
        %v1226 = vrot.slane %v1225, 1
        %v1227 = vadd.f32 %v1225, %v1226
        %s1228 = vtos %v1227
        %s1229 = sadd.f32 %s1151, %s1228
        %v1230 = vsel %vm1131, %v559, 0.0
        %v1231 = vsel %vm1132, %v560, 0.0
        %v1232 = vsel %vm1133, %v563, 0.0
        %v1233 = vsel %vm1211, %v1230, 0.0
        %v1234 = vsel %vm1211, %v1231, 0.0
        %v1235 = vsel %vm1211, %v1232, 0.0
        %v1236 = vsel %vm712, %v1233, 0.0
        %v1237 = vsel %vm712, %v1234, 0.0
        %v1238 = vadd.f32 %v1236, %v1237
        %v1239 = vsel %vm712, %v1235, 0.0
        %v1240 = vadd.f32 %v1238, %v1239
        %1241 = vadd.xlane.f32.xlu0 %v1240
        %v1242 = vpop.xlane.xlu0 %1241
        %v1243 = vrot.slane %v1242, 4
        %v1244 = vadd.f32 %v1242, %v1243
        %v1245 = vrot.slane %v1244, 2
        %v1246 = vadd.f32 %v1244, %v1245
        %v1247 = vrot.slane %v1246, 1
        %v1248 = vadd.f32 %v1246, %v1247
        %s1249 = vtos %v1248
        %vm1250 = vcmp.eq.s32.totalorder %v580, 2
        %v1251 = vstv %s1229
        %v1252 = vsel %vm1250, %v1251, %v1039
        %vm1253 = vcmp.eq.s32.totalorder %v580, 6
        %v1254 = vstv %s1249
        %v1255 = vsel %vm1253, %v1254, %v1252
        %v1256 = vand.u32 %v576, 7
        %v1257 = vand.u32 %v577, 7
        %v1258 = vand.u32 %v578, 7
        %vm1259 = vcmp.eq.s32.totalorder %v1256, 0
        %vm1260 = vcmp.eq.s32.totalorder %v1257, 0
        %vm1261 = vcmp.eq.s32.totalorder %v1258, 0
        %vm1262 = vmand %vm581, %vm1259
        %vm1263 = vmand %vm582, %vm1260
        %vm1264 = vmand %vm583, %vm1261
        %v1265 = vand.u32 %v580, 7
        %vm1266 = vcmp.eq.s32.totalorder %v1265, 0
        %1267 = vrot.lane.b32.xlu0 %v566, 8
        %v1268 = vpop.permute.xlu0 %1267
        %1269 = vrot.lane.b32.xlu0 %v567, 8
        %v1270 = vpop.permute.xlu0 %1269
        %1271 = vrot.lane.b32.xlu0 %v569, 8
        %v1272 = vpop.permute.xlu0 %1271
        %v1276 = vsub.f32 %v600, %v1268
        %v1277 = vsub.f32 %v601, %v1270
        %v1278 = vsub.f32 %v602, %v1272
        %v1279 = vand.u32 2147483647, %v1276
        %v1280 = vand.u32 2147483647, %v1277
        %v1281 = vand.u32 2147483647, %v1278
        %vm1282 = vcmp.lt.f32.partialorder %v1279, 1.0
        %vm1283 = vcmp.lt.f32.partialorder %v1280, 1.0
        %vm1284 = vcmp.lt.f32.partialorder %v1281, 1.0
        %v1285 = vmul.f32 %v1276, 0.5
        %v1286 = vmul.f32 %v1277, 0.5
        %v1287 = vmul.f32 %v1278, 0.5
        %v1288 = vmul.f32 %v1285, %v1276
        %v1289 = vmul.f32 %v1286, %v1277
        %v1290 = vmul.f32 %v1287, %v1278
        %v1291 = vsub.f32 %v1279, 0.5
        %v1292 = vsub.f32 %v1280, 0.5
        %v1293 = vsub.f32 %v1281, 0.5
        %v1294 = vsel %vm1282, %v1288, %v1291
        %v1295 = vsel %vm1283, %v1289, %v1292
        %v1296 = vsel %vm1284, %v1290, %v1293
        %1297 = vrot.lane.b32.xlu0 %v618, 120
        %v1298 = vpop.permute.xlu0 %1297
        %1299 = vrot.lane.b32.xlu0 %v619, 120
        %v1300 = vpop.permute.xlu0 %1299
        %1301 = vrot.lane.b32.xlu0 %v620, 120
        %v1302 = vpop.permute.xlu0 %1301
        %v1306 = vmul.f32 %v559, %v1298
        %v1307 = vmul.f32 %v560, %v1300
        %v1308 = vmul.f32 %v563, %v1302
        %1312 = vrot.lane.b32.xlu0 %v1306, 8
        %v1313 = vpop.permute.xlu0 %1312
        %1314 = vrot.lane.b32.xlu0 %v1307, 8
        %v1315 = vpop.permute.xlu0 %1314
        %1316 = vrot.lane.b32.xlu0 %v1308, 8
        %v1317 = vpop.permute.xlu0 %1316
        %v1321 = vmul.f32 %v1294, %v1313
        %v1322 = vmul.f32 %v1295, %v1315
        %v1323 = vmul.f32 %v1296, %v1317
        %v1324 = vadd.s32 %v580, 8
        %vm1325 = vcmp.lt.s32.totalorder %v1324, 16
        %vm1326 = vmand %vm1325, %vm1266
        %v1327 = vsel %vm1326, 1, 0
        %vm1328 = vcmp.eq.s32.totalorder %v1327, 1
        %1332 = vrot.lane.b32.xlu0 %v1321, 120
        %v1333 = vpop.permute.xlu0 %1332
        %1334 = vrot.lane.b32.xlu0 %v1322, 120
        %v1335 = vpop.permute.xlu0 %1334
        %1336 = vrot.lane.b32.xlu0 %v1323, 120
        %v1337 = vpop.permute.xlu0 %1336
        %v1341 = vsel %vm1328, %v1333, 0.0
        %v1342 = vsel %vm1328, %v1335, 0.0
        %v1343 = vsel %vm1328, %v1337, 0.0
        %v1344 = vsel %vm1262, 1, 0
        %v1345 = vsel %vm1263, 1, 0
        %v1346 = vsel %vm1264, 1, 0
        %vm1347 = vcmp.eq.s32.totalorder %v1344, 1
        %vm1348 = vcmp.eq.s32.totalorder %v1345, 1
        %vm1349 = vcmp.eq.s32.totalorder %v1346, 1
        %v1350 = vsel %vm1347, %v1341, 0.0
        %v1351 = vsel %vm1348, %v1342, 0.0
        %v1352 = vsel %vm1349, %v1343, 0.0
        %v1353 = vsel %vm712, %v1350, 0.0
        %v1354 = vsel %vm712, %v1351, 0.0
        %v1355 = vadd.f32 %v1353, %v1354
        %v1356 = vsel %vm712, %v1352, 0.0
        %v1357 = vadd.f32 %v1355, %v1356
        %1358 = vadd.xlane.f32.xlu0 %v1357
        %v1359 = vpop.xlane.xlu0 %1358
        %v1360 = vrot.slane %v1359, 4
        %v1361 = vadd.f32 %v1359, %v1360
        %v1362 = vrot.slane %v1361, 2
        %v1363 = vadd.f32 %v1361, %v1362
        %v1364 = vrot.slane %v1363, 1
        %v1365 = vadd.f32 %v1363, %v1364
        %s1366 = vtos %v1365
        %s1367 = sadd.f32 %s1366, 0.0
        %v1368 = vsub.f32 %v567, %v566
        %v1369 = vsub.f32 %v569, %v567
        %v1370 = vsub.f32 %v566, %v569
        %v1371 = vand.u32 2147483647, %v1368
        %v1372 = vand.u32 2147483647, %v1369
        %v1373 = vand.u32 2147483647, %v1370
        %vm1374 = vcmp.lt.f32.partialorder %v1371, 1.0
        %vm1375 = vcmp.lt.f32.partialorder %v1372, 1.0
        %vm1376 = vcmp.lt.f32.partialorder %v1373, 1.0
        %v1377 = vmul.f32 %v1368, 0.5
        %v1378 = vmul.f32 %v1369, 0.5
        %v1379 = vmul.f32 %v1370, 0.5
        %v1380 = vmul.f32 %v1377, %v1368
        %v1381 = vmul.f32 %v1378, %v1369
        %v1382 = vmul.f32 %v1379, %v1370
        %v1383 = vsub.f32 %v1371, 0.5
        %v1384 = vsub.f32 %v1372, 0.5
        %v1385 = vsub.f32 %v1373, 0.5
        %v1386 = vsel %vm1374, %v1380, %v1383
        %v1387 = vsel %vm1375, %v1381, %v1384
        %v1388 = vsel %vm1376, %v1382, %v1385
        %v1389 = vmul.f32 %v559, %v560
        %v1390 = vmul.f32 %v560, %v563
        %v1391 = vmul.f32 %v563, %v559
        %v1392 = vmul.f32 %v1386, %v1389
        %v1393 = vmul.f32 %v1387, %v1390
        %v1394 = vmul.f32 %v1388, %v1391
        %v1395 = vadd.s32 %v576, 8
        %v1396 = vadd.s32 %v577, 8
        %v1397 = vadd.s32 %v578, 8
        %vm1398 = vcmp.lt.s32.totalorder %v1395, 16
        %vm1399 = vcmp.lt.s32.totalorder %v1396, 16
        %vm1400 = vcmp.lt.s32.totalorder %v1397, 16
        %vm1401 = vmand %vm1262, %vm1398
        %vm1402 = vmand %vm1263, %vm1399
        %vm1403 = vmand %vm1264, %vm1400
        %v1404 = vsel %vm1401, 1, 0
        %v1405 = vsel %vm1402, 1, 0
        %v1406 = vsel %vm1403, 1, 0
        %vm1407 = vcmp.eq.s32.totalorder %v1404, 1
        %vm1408 = vcmp.eq.s32.totalorder %v1405, 1
        %vm1409 = vcmp.eq.s32.totalorder %v1406, 1
        %v1410 = vsel %vm1407, %v1392, 0.0
        %v1411 = vsel %vm1408, %v1393, 0.0
        %v1412 = vsel %vm1409, %v1394, 0.0
        %v1413 = vsel %vm1266, 1, 0
        %vm1414 = vcmp.eq.s32.totalorder %v1413, 1
        %v1415 = vsel %vm1414, %v1410, 0.0
        %v1416 = vsel %vm1414, %v1411, 0.0
        %v1417 = vsel %vm1414, %v1412, 0.0
        %v1418 = vsel %vm712, %v1415, 0.0
        %v1419 = vsel %vm712, %v1416, 0.0
        %v1420 = vadd.f32 %v1418, %v1419
        %v1421 = vsel %vm712, %v1417, 0.0
        %v1422 = vadd.f32 %v1420, %v1421
        %1423 = vadd.xlane.f32.xlu0 %v1422
        %v1424 = vpop.xlane.xlu0 %1423
        %v1425 = vrot.slane %v1424, 4
        %v1426 = vadd.f32 %v1424, %v1425
        %v1427 = vrot.slane %v1426, 2
        %v1428 = vadd.f32 %v1426, %v1427
        %v1429 = vrot.slane %v1428, 1
        %v1430 = vadd.f32 %v1428, %v1429
        %s1431 = vtos %v1430
        %s1432 = sadd.f32 %s1367, %s1431
        %v1433 = vsel %vm1347, %v559, 0.0
        %v1434 = vsel %vm1348, %v560, 0.0
        %v1435 = vsel %vm1349, %v563, 0.0
        %v1436 = vsel %vm1414, %v1433, 0.0
        %v1437 = vsel %vm1414, %v1434, 0.0
        %v1438 = vsel %vm1414, %v1435, 0.0
        %v1439 = vsel %vm712, %v1436, 0.0
        %v1440 = vsel %vm712, %v1437, 0.0
        %v1441 = vadd.f32 %v1439, %v1440
        %v1442 = vsel %vm712, %v1438, 0.0
        %v1443 = vadd.f32 %v1441, %v1442
        %1444 = vadd.xlane.f32.xlu0 %v1443
        %v1445 = vpop.xlane.xlu0 %1444
        %v1446 = vrot.slane %v1445, 4
        %v1447 = vadd.f32 %v1445, %v1446
        %v1448 = vrot.slane %v1447, 2
        %v1449 = vadd.f32 %v1447, %v1448
        %v1450 = vrot.slane %v1449, 1
        %v1451 = vadd.f32 %v1449, %v1450
        %s1452 = vtos %v1451
        %vm1453 = vcmp.eq.s32.totalorder %v580, 3
        %v1454 = vstv %s1432
        %v1455 = vsel %vm1453, %v1454, %v1255
        %vm1456 = vcmp.eq.s32.totalorder %v580, 7
        %v1457 = vstv %s1452
        %v1458 = vsel %vm1456, %v1457, %v1455
        %1459 = vst [vmem:[%s539] sm:$0x1] %v1458
        %s1460 = sand.u32 %s246, 1
        %s1461 = scalar_lea.sflag [#allocation4], %s1460
        %s1462 = sand.u32 %s246, 1
        %s1463 = scalar_lea.vmem [#allocation13], %s1462
        // Predicated region
        $region69: #{tpu_custom_call.1} parent=43 // pred_check
          %p1464 = pneg %p256
        $region70: #{tpu_custom_call.1} parent=43 // pred_check_branch
          %1466 = sbr.rel (%p1464) target = $region72
        $region71: #{tpu_custom_call.1} parent=43 // pred_region
          %1468 = vsyncadd %s1461, 0
          %s1469 = sadd.s32 %s37, %s36
          %s1470 = scalar_lea.hbm %s6, %s1469
          %s1472 = sshll.u32 %s1463, 4
          %s1473 = int_to_ptr.vmem [resolvable:$true] %s1472
          %s1474 = sshll.u32 %s1470, 4
          %s1475 = int_to_ptr.hbm [resolvable:$true] %s1474
          %1477 = dma.vmem_to_hbm [thread:$0]  %s1473, 16, %s1475, %s1461
        $region72: #{tpu_custom_call.1} parent=43 // pred_fallthru
          _
      $region44: #{tpu_custom_call.1} parent=5 // pred_fallthru
        _
      %p1478 = scmp.le.s32.totalorder 2, %s27
      // Predicated region
      $region73: #{tpu_custom_call.1} parent=5 // pred_check
        %p1479 = pneg %p1478
      $region74: #{tpu_custom_call.1} parent=5 // pred_check_branch
        %1481 = sbr.rel (%p1479) target = $region76
      $region75: #{tpu_custom_call.1} parent=5 // pred_region
        %s1482 = ssub.s32 %s27, 2
        // Predicated region
        $region77: #{tpu_custom_call.1} parent=75 // pred_check
          %p1483 = pneg %p262
        $region78: #{tpu_custom_call.1} parent=75 // pred_check_branch
          %1485 = sbr.rel (%p1483) target = $region80
        $region79: #{tpu_custom_call.1} parent=75 // pred_region
          %s1486 = sand.u32 %s247, 1
          %s1487 = scalar_lea.sflag [#allocation4], %s1486
          %s1488 = sand.u32 %s247, 1
          %s1489 = scalar_lea.vmem [#allocation13], %s1488
          %1491 = dma.done %s1487, 16
        $region80: #{tpu_custom_call.1} parent=75 // pred_fallthru
          _
      $region76: #{tpu_custom_call.1} parent=5 // pred_fallthru
        _
    $region6: #{tpu_custom_call.1} parent=1 // loop_footer
      %s31 = sadd.s32 1, %s27
    $region7: #{tpu_custom_call.1} parent=1 // loop_footer_branch
      %26 = sbr.rel target = $region3
    $region8: #{tpu_custom_call.1} parent=1 // loop_exit
      _
    %1492 = vsyncpa [#allocation3], 1
    %s1493 = scalar_lea.sflag [#allocation3], 1
    %1494 = vsyncpa %s1493, 1
    %1495 = vsyncpa [#allocation6], 1
    %s1496 = scalar_lea.sflag [#allocation6], 1
    %1497 = vsyncpa %s1496, 1
    %1498 = vsyncpa [#allocation9], 1
    %s1499 = scalar_lea.sflag [#allocation9], 1
    %1500 = vsyncpa %s1499, 1
    %1501 = vsyncpa [#allocation12], 1
    %s1502 = scalar_lea.sflag [#allocation12], 1
    %1503 = vsyncpa %s1502, 1
    %1504 = vsyncpa [#allocation4], 1
    %s1505 = scalar_lea.sflag [#allocation4], 1
    %1506 = vsyncpa %s1505, 1

</llo_original>
